<compile_context>
chip_gen: v7x
topology: tpu7x:2x2x1
jax: 0.10.0
libtpu: 0.0.40
codegen_flags: <defaults>
</compile_context>

<pallas_src>
import functools

import jax
import jax.numpy as jnp
from jax.experimental import pallas as pl
from jax.experimental.pallas import tpu as pltpu


def _round_up(a, b):
    return (a + b - 1) // b * b


def _sage_kernel(adj_ref, xk_ref, xs_ref, w_ref, rw_ref, b_ref, o_ref,
                 acc_ref, *, c_in):
    """Grid = (row tiles i, neighbor tiles k); k is the reduction axis.

    adj_ref : (TM, TK)         int8 adjacency tile (rows = target nodes)
    xk_ref  : (TK, Ci)         bf16 neighbor features (Ci includes ones lane)
    xs_ref  : (TM, Ci)         bf16 self features
    w_ref   : (Ci, Co)         bf16 neighbor weight (padded rows are zero)
    rw_ref  : (Ci, Co)         bf16 root weight (padded rows are zero)
    b_ref   : (1, Co)          f32 bias
    o_ref   : (TM, Co)         f32 output tile (written on last k step)
    acc_ref : (TM, Ci) f32     VMEM neighbor-sum accumulator; lane `c_in`
                               accumulates the degree (x ones lane trick).
    """
    k = pl.program_id(1)
    nk = pl.num_programs(1)

    @pl.when(k == 0)
    def _init():
        acc_ref[...] = jnp.zeros_like(acc_ref)

    # int8 -> bf16 upcast on the loaded tile (VPU work, hidden under the DMA),
    # then bf16 x bf16 MXU matmul with f32 accumulation in scratch.
    adj = adj_ref[...].astype(jnp.bfloat16)
    acc_ref[...] += jnp.dot(adj, xk_ref[...],
                            preferred_element_type=jnp.float32)

    @pl.when(k == nk - 1)
    def _finalize():
        acc = acc_ref[...]
        # Degree came for free out of the MXU via the constant-1 lane of x.
        deg = acc[:, c_in:c_in + 1]                          # (TM, 1) exact
        inv_deg = pl.reciprocal(jnp.maximum(deg, 1.0), approx=True)
        agg = (acc * inv_deg).astype(jnp.bfloat16)           # (TM, Ci)
        # Padded / ones lanes of agg and xs hit zero weight rows -> harmless.
        out = jnp.dot(agg, w_ref[...], preferred_element_type=jnp.float32)
        out += jnp.dot(xs_ref[...], rw_ref[...],
                       preferred_element_type=jnp.float32)
        out += b_ref[...]
        o_ref[...] = out.astype(o_ref.dtype)


def prepare_adjacency(adj, *, tm=512, tk=2048):
    """One-time prep of the dense adjacency: int8 cast + tile padding.

    Amortized across layers / training steps so the O(N^2) pass over the
    dominant operand is not repeated inside every SAGEConv call.
    """
    n = adj.shape[0]
    nr = _round_up(n, tm)
    nc = _round_up(n, tk)
    adj_i8 = jnp.zeros((nr, nc), jnp.int8)
    adj_i8 = adj_i8.at[:n, :n].set(adj.astype(jnp.int8))
    return adj_i8


@functools.partial(jax.jit, static_argnames=("n_nodes", "tm", "tk"))
def sage_conv(x, adj_i8, weight, root_weight, bias, *, n_nodes,
              tm=512, tk=2048):
    """One SAGEConv forward.

    x        : (N, C_in) f32 node features
    adj_i8   : output of prepare_adjacency (int8, (N_pad_r, N_pad_c))
    returns  : (N, C_out) f32
    """
    n = n_nodes
    c_in = x.shape[1]
    c_out = weight.shape[1]
    nr_pad, nc_pad = adj_i8.shape
    assert nr_pad % tm == 0 and nc_pad % tk == 0, "adjacency not tile-padded"

    # +1 lane reserved for the constant-1 degree column; lane-dense padding.
    ci_pad = _round_up(c_in + 1, 128)
    co_pad = _round_up(c_out, 128)
    nx_pad = max(nr_pad, nc_pad)

    # Single bf16 copy of x feeds both the neighbor stream and the self path.
    x_p = jnp.zeros((nx_pad, ci_pad), jnp.bfloat16)
    x_p = x_p.at[:n, :c_in].set(x.astype(jnp.bfloat16))
    x_p = x_p.at[:, c_in].set(jnp.ones((nx_pad,), jnp.bfloat16))  # deg lane

    w_p = jnp.zeros((ci_pad, co_pad), jnp.bfloat16)
    w_p = w_p.at[:c_in, :c_out].set(weight.astype(jnp.bfloat16))
    rw_p = jnp.zeros((ci_pad, co_pad), jnp.bfloat16)
    rw_p = rw_p.at[:c_in, :c_out].set(root_weight.astype(jnp.bfloat16))
    b_p = jnp.zeros((1, co_pad), jnp.float32)
    b_p = b_p.at[0, :c_out].set(bias.astype(jnp.float32))

    grid = (nr_pad // tm, nc_pad // tk)
    kernel = functools.partial(_sage_kernel, c_in=c_in)

    out = pl.pallas_call(
        kernel,
        out_shape=jax.ShapeDtypeStruct((nr_pad, co_pad), jnp.float32),
        grid_spec=pltpu.PrefetchScalarGridSpec(
            num_scalar_prefetch=0,
            grid=grid,
            in_specs=[
                pl.BlockSpec((tm, tk), lambda i, k: (i, k)),       # adj (i8)
                pl.BlockSpec((tk, ci_pad), lambda i, k: (k, 0)),   # x neighbors
                pl.BlockSpec((tm, ci_pad), lambda i, k: (i, 0)),   # x self
                pl.BlockSpec((ci_pad, co_pad), lambda i, k: (0, 0)),   # W
                pl.BlockSpec((ci_pad, co_pad), lambda i, k: (0, 0)),   # W_root
                pl.BlockSpec((1, co_pad), lambda i, k: (0, 0)),        # bias
            ],
            out_specs=pl.BlockSpec((tm, co_pad), lambda i, k: (i, 0)),
            scratch_shapes=[pltpu.VMEM((tm, ci_pad), jnp.float32)],
        ),
        compiler_params=pltpu.CompilerParams(
            dimension_semantics=("parallel", "arbitrary"),
            vmem_limit_bytes=32 << 20),
    )(adj_i8, x_p, x_p, w_p, rw_p, b_p)

    return out[:n, :c_out]


def sage_forward(x, adj_i8, params, *, n_nodes, tm, tk,
                 dropout=0.0, training=False, rng=None):
    """Full SAGE forward: SAGEConv -> ReLU -> dropout (train) per layer."""
    n_layers = len(params)
    for li, (w, rw, b) in enumerate(params):
        x = sage_conv(x, adj_i8, w, rw, b, n_nodes=n_nodes, tm=tm, tk=tk)
        if li < n_layers - 1:
            x = jax.nn.relu(x)
            if training and dropout > 0.0:
                rng, sub = jax.random.split(rng)
                keep = jax.random.bernoulli(sub, 1.0 - dropout, x.shape)
                x = jnp.where(keep, x / (1.0 - dropout), 0.0)
    return x


# ----------------------------- pure-JAX reference ---------------------------

def sage_conv_ref(x, adj, weight, root_weight, bias):
    """Reference mirroring the kernel's bf16 casts (f32 accumulation)."""
    adj_b = adj.astype(jnp.bfloat16)                      # binary -> exact
    x_b = x.astype(jnp.bfloat16)
    acc = jnp.dot(adj_b, x_b, preferred_element_type=jnp.float32)
    deg = jnp.maximum(adj.sum(axis=-1, keepdims=True), 1.0)
    agg = (acc / deg).astype(jnp.bfloat16)
    out = jnp.dot(agg, weight.astype(jnp.bfloat16),
                  preferred_element_type=jnp.float32)
    out += jnp.dot(x_b, root_weight.astype(jnp.bfloat16),
                   preferred_element_type=jnp.float32)
    return out + bias.astype(jnp.float32)


def sage_forward_ref(x, adj, params):
    n_layers = len(params)
    for li, (w, rw, b) in enumerate(params):
        x = sage_conv_ref(x, adj, w, rw, b)
        if li < n_layers - 1:
            x = jax.nn.relu(x)
    return x


def glorot(key, shape):
    fan_in, fan_out = shape
    limit = jnp.sqrt(6.0 / (fan_in + fan_out))
    return jax.random.uniform(key, shape, jnp.float32, -limit, limit)


if __name__ == "__main__":
    # Small ogbn-proteins-like shapes: 8 input features, 3 SAGEConv layers.
    # tm=tk=256 -> grid (2, 2): exercises both the parallel row axis and the
    # K accumulation / init / finalize paths.  Production defaults are larger.
    N, C_IN, HIDDEN, C_OUT, NUM_LAYERS = 512, 8, 64, 16, 3
    TM, TK = 256, 256

    key = jax.random.PRNGKey(0)
    k_x, k_adj, k_par = jax.random.split(key, 3)

    x = jax.random.normal(k_x, (N, C_IN), jnp.float32)
    # Sparse-ish binary adjacency (dense representation), p = 0.05.
    adj = (jax.random.uniform(k_adj, (N, N)) < 0.05).astype(jnp.float32)
    # Isolated node exercises the deg=0 clamp path.
    adj = adj.at[7, :].set(0.0)

    # Parameters (glorot weights, zero bias) for in -> hidden -> hidden -> out.
    dims = [C_IN] + [HIDDEN] * (NUM_LAYERS - 1) + [C_OUT]
    params = []
    for li in range(NUM_LAYERS):
        k_par, kw, kr = jax.random.split(k_par, 3)
        params.append((glorot(kw, (dims[li], dims[li + 1])),
                       glorot(kr, (dims[li], dims[li + 1])),
                       jnp.zeros((dims[li + 1],), jnp.float32)))

    # One-time adjacency prep (int8 + tile padding), amortized over layers.
    adj_i8 = prepare_adjacency(adj, tm=TM, tk=TK)

    # --- single SAGEConv check ---
    w0, rw0, b0 = params[0]
    out1 = sage_conv(x, adj_i8, w0, rw0, b0, n_nodes=N, tm=TM, tk=TK)
    out1 = jax.block_until_ready(out1)
    ref1 = sage_conv_ref(x, adj, w0, rw0, b0)
    assert out1.shape == (N, HIDDEN)
    assert bool(jnp.allclose(out1, ref1, atol=3e-2, rtol=3e-2)), (
        float(jnp.max(jnp.abs(out1 - ref1))))

    # --- full SAGE network (eval mode: dropout is identity) ---
    out = sage_forward(x, adj_i8, params, n_nodes=N, tm=TM, tk=TK,
                       dropout=0.5, training=False)
    out = jax.block_until_ready(out)
    ref = sage_forward_ref(x, adj, params)
    assert out.shape == (N, C_OUT)
    assert bool(jnp.isfinite(out).all())
    assert bool(jnp.allclose(out, ref, atol=5e-2, rtol=5e-2)), (
        float(jnp.max(jnp.abs(out - ref))))

    print("KERNEL_OK")
</pallas_src>

<mosaic_0001>
module attributes {stable_mosaic.version = 11 : i64} {
  func.func @_sage_kernel(%arg0: i32, %arg1: i32, %arg2: memref<256x256xi8, #tpu.memory_space<vmem>>, %arg3: memref<256x128xbf16, #tpu.memory_space<vmem>>, %arg4: memref<256x128xbf16, #tpu.memory_space<vmem>>, %arg5: memref<128x128xbf16, #tpu.memory_space<vmem>>, %arg6: memref<128x128xbf16, #tpu.memory_space<vmem>>, %arg7: memref<1x128xf32, #tpu.memory_space<vmem>>, %arg8: memref<256x128xf32, #tpu.memory_space<vmem>>, %arg9: memref<256x128xf32, #tpu.memory_space<vmem>>) attributes {dimension_semantics = [#tpu.dimension_semantics<parallel>, #tpu.dimension_semantics<arbitrary>], iteration_bounds = array<i64: 2, 2>, scalar_prefetch = 0 : i64, scratch_operands = 1 : i64, tpu.core_type = #tpu.core_type<tc>, window_params = [{transform_indices = @transform_0, window_bounds = array<i64: 256, 256>}, {transform_indices = @transform_1, window_bounds = array<i64: 256, 128>}, {transform_indices = @transform_2, window_bounds = array<i64: 256, 128>}, {pipeline_mode = #tpu.pipeline_mode<synchronous>, transform_indices = @transform_3, window_bounds = array<i64: 128, 128>}, {pipeline_mode = #tpu.pipeline_mode<synchronous>, transform_indices = @transform_4, window_bounds = array<i64: 128, 128>}, {pipeline_mode = #tpu.pipeline_mode<synchronous>, transform_indices = @transform_5, window_bounds = array<i64: 1, 128>}, {transform_indices = @transform_6, window_bounds = array<i64: 256, 128>}]} {
    %c0_i32 = arith.constant 0 : i32
    %0 = arith.cmpi eq, %arg1, %c0_i32 : i32
    %1 = arith.extui %0 : i1 to i32
    %c0_i32_0 = arith.constant 0 : i32
    %2 = arith.cmpi ne, %1, %c0_i32_0 : i32
    scf.if %2 {
      %cst_9 = arith.constant 0.000000e+00 : f32
      %13 = vector.broadcast %cst_9 : f32 to vector<256x128xf32>
      %c0_10 = arith.constant 0 : index
      %c0_11 = arith.constant 0 : index
      %14 = vector.load %arg9[%c0_10, %c0_11] : memref<256x128xf32, #tpu.memory_space<vmem>>, vector<256x128xf32>
      tpu.vector_store %arg9[%c0_10, %c0_11], %13 {strides = array<i32>} : memref<256x128xf32, #tpu.memory_space<vmem>>, vector<256x128xf32>,
    } else {
    }
    %c0 = arith.constant 0 : index
    %c0_1 = arith.constant 0 : index
    %3 = vector.load %arg2[%c0, %c0_1] : memref<256x256xi8, #tpu.memory_space<vmem>>, vector<256x256xi8>
    %4 = arith.sitofp %3 : vector<256x256xi8> to vector<256x256xbf16>
    %c0_2 = arith.constant 0 : index
    %c0_3 = arith.constant 0 : index
    %5 = vector.load %arg9[%c0_2, %c0_3] : memref<256x128xf32, #tpu.memory_space<vmem>>, vector<256x128xf32>
    %c0_4 = arith.constant 0 : index
    %c0_5 = arith.constant 0 : index
    %6 = vector.load %arg3[%c0_4, %c0_5] : memref<256x128xbf16, #tpu.memory_space<vmem>>, vector<256x128xbf16>
    %cst = arith.constant dense<0.000000e+00> : vector<256x128xf32>
    %7 = tpu.matmul %4, %6, %cst {dimension_numbers = #tpu.dot_dimension_numbers<[1], [0], [0], [1], [0, 0, 1, 1], [], []>} : vector<256x256xbf16>, vector<256x128xbf16>, vector<256x128xf32> -> vector<256x128xf32>
    %8 = arith.addf %5, %7 : vector<256x128xf32>
    %c0_6 = arith.constant 0 : index
    %c0_7 = arith.constant 0 : index
    %9 = vector.load %arg9[%c0_6, %c0_7] : memref<256x128xf32, #tpu.memory_space<vmem>>, vector<256x128xf32>
    tpu.vector_store %arg9[%c0_6, %c0_7], %8 {strides = array<i32>} : memref<256x128xf32, #tpu.memory_space<vmem>>, vector<256x128xf32>,
    %c1_i32 = arith.constant 1 : i32
    %10 = arith.cmpi eq, %arg1, %c1_i32 : i32
    %11 = arith.extui %10 : i1 to i32
    %c0_i32_8 = arith.constant 0 : i32
    %12 = arith.cmpi ne, %11, %c0_i32_8 : i32
    scf.if %12 {
      %c0_9 = arith.constant 0 : index
      %c0_10 = arith.constant 0 : index
      %13 = vector.load %arg9[%c0_9, %c0_10] : memref<256x128xf32, #tpu.memory_space<vmem>>, vector<256x128xf32>
      %14 = vector.extract_strided_slice %13 {offsets = [0, 8], sizes = [256, 1], strides = [1, 1]} : vector<256x128xf32> to vector<256x1xf32>
      %cst_11 = arith.constant 1.000000e+00 : f32
      %15 = vector.broadcast %cst_11 : f32 to vector<256x1xf32>
      %16 = arith.maximumf %14, %15 : vector<256x1xf32>
      %17 = tpu.reciprocal %16 {approx = true} : vector<256x1xf32> -> vector<256x1xf32>
      %18 = vector.broadcast %17 : vector<256x1xf32> to vector<256x128xf32>
      %19 = arith.mulf %13, %18 : vector<256x128xf32>
      %20 = arith.truncf %19 : vector<256x128xf32> to vector<256x128xbf16>
      %c0_12 = arith.constant 0 : index
      %c0_13 = arith.constant 0 : index
      %21 = vector.load %arg5[%c0_12, %c0_13] : memref<128x128xbf16, #tpu.memory_space<vmem>>, vector<128x128xbf16>
      %cst_14 = arith.constant dense<0.000000e+00> : vector<256x128xf32>
      %22 = tpu.matmul %20, %21, %cst_14 {dimension_numbers = #tpu.dot_dimension_numbers<[1], [0], [0], [1], [0, 0, 1, 1], [], []>} : vector<256x128xbf16>, vector<128x128xbf16>, vector<256x128xf32> -> vector<256x128xf32>
      %c0_15 = arith.constant 0 : index
      %c0_16 = arith.constant 0 : index
      %23 = vector.load %arg4[%c0_15, %c0_16] : memref<256x128xbf16, #tpu.memory_space<vmem>>, vector<256x128xbf16>
      %c0_17 = arith.constant 0 : index
      %c0_18 = arith.constant 0 : index
      %24 = vector.load %arg6[%c0_17, %c0_18] : memref<128x128xbf16, #tpu.memory_space<vmem>>, vector<128x128xbf16>
      %cst_19 = arith.constant dense<0.000000e+00> : vector<256x128xf32>
      %25 = tpu.matmul %23, %24, %cst_19 {dimension_numbers = #tpu.dot_dimension_numbers<[1], [0], [0], [1], [0, 0, 1, 1], [], []>} : vector<256x128xbf16>, vector<128x128xbf16>, vector<256x128xf32> -> vector<256x128xf32>
      %26 = arith.addf %22, %25 : vector<256x128xf32>
      %c0_20 = arith.constant 0 : index
      %c0_21 = arith.constant 0 : index
      %27 = vector.load %arg7[%c0_20, %c0_21] : memref<1x128xf32, #tpu.memory_space<vmem>>, vector<1x128xf32>
      %28 = vector.broadcast %27 : vector<1x128xf32> to vector<256x128xf32>
      %29 = arith.addf %26, %28 : vector<256x128xf32>
      %c0_22 = arith.constant 0 : index
      %c0_23 = arith.constant 0 : index
      %30 = vector.load %arg8[%c0_22, %c0_23] : memref<256x128xf32, #tpu.memory_space<vmem>>, vector<256x128xf32>
      tpu.vector_store %arg8[%c0_22, %c0_23], %29 {strides = array<i32>} : memref<256x128xf32, #tpu.memory_space<vmem>>, vector<256x128xf32>,
    } else {
    }
    return
  }
  func.func @transform_0(%arg0: i32, %arg1: i32) -> (i32, i32) {
    %c0_i32 = arith.constant 0 : i32
    return %arg0, %arg1 : i32, i32
  }
  func.func @transform_1(%arg0: i32, %arg1: i32) -> (i32, i32) {
    %c0_i32 = arith.constant 0 : i32
    %c0_i32_0 = arith.constant 0 : i32
    return %arg1, %c0_i32 : i32, i32
  }
  func.func @transform_2(%arg0: i32, %arg1: i32) -> (i32, i32) {
    %c0_i32 = arith.constant 0 : i32
    %c0_i32_0 = arith.constant 0 : i32
    return %arg0, %c0_i32 : i32, i32
  }
  func.func @transform_3(%arg0: i32, %arg1: i32) -> (i32, i32) {
    %c0_i32 = arith.constant 0 : i32
    %c0_i32_0 = arith.constant 0 : i32
    %c0_i32_1 = arith.constant 0 : i32
    return %c0_i32, %c0_i32_0 : i32, i32
  }
  func.func @transform_4(%arg0: i32, %arg1: i32) -> (i32, i32) {
    %c0_i32 = arith.constant 0 : i32
    %c0_i32_0 = arith.constant 0 : i32
    %c0_i32_1 = arith.constant 0 : i32
    return %c0_i32, %c0_i32_0 : i32, i32
  }
  func.func @transform_5(%arg0: i32, %arg1: i32) -> (i32, i32) {
    %c0_i32 = arith.constant 0 : i32
    %c0_i32_0 = arith.constant 0 : i32
    %c0_i32_1 = arith.constant 0 : i32
    return %c0_i32, %c0_i32_0 : i32, i32
  }
  func.func @transform_6(%arg0: i32, %arg1: i32) -> (i32, i32) {
    %c0_i32 = arith.constant 0 : i32
    %c0_i32_0 = arith.constant 0 : i32
    return %arg0, %c0_i32 : i32, i32
  }
}

</mosaic_0001>

<llo_original>
// kernel: sage_conv.1
$region0: #{sage_conv.1}
  #allocation0 [shape = 'u32[]', space=smem, size = 0x4, offset = 0x4, fixed_abs, tag = 'smem constant byte address 0x4 - core index']
  #allocation1 [shape = 'u32[144,128]{1,0:T(1,128)}', space=vmem, size = 0x12000, scoped, tag = 'internal scratch']
  #allocation2 [shape = 'f32[256,128]{1,0:T(8,128)}', space=vmem, size = 0x20000, scoped, tag = 'scratch operand']
  %s0 = inlined_call_operand.vmem [shape: s8[512,512], index: 0, kind: input, shape index: {}]
  %s1 = inlined_call_operand.vmem [shape: bf16[512,128], index: 1, kind: input, shape index: {}, may-alias: {1,2}]
  %s2 = inlined_call_operand.vmem [shape: bf16[512,128], index: 2, kind: input, shape index: {}, may-alias: {1,2}]
  %s3 = inlined_call_operand.vmem [shape: bf16[128,128], index: 3, kind: input, shape index: {}]
  %s4 = inlined_call_operand.vmem [shape: bf16[128,128], index: 4, kind: input, shape index: {}]
  %s5 = inlined_call_operand.vmem [shape: f32[1,128], index: 5, kind: input, shape index: {}]
  %s6 = inlined_call_operand.vmem [shape: f32[512,128], index: 6, kind: output, shape index: {}]
  %s7 = sld [smem:[#allocation0]]
  $region88: #{sage_conv.1} parent=0
    _
  %s9 = ssub.s32 1, %s7
  %s10 = scalar_select 0, %s9, %s7
  $region1: #{sage_conv.1} parent=0
    #allocation3 [shape = 'u8[131072]{0}', space=vmem, size = 0x20000, scoped, tag = 'input window, operand 0']
    loop: start=0, step=1, limit=6
    $region2: #{sage_conv.1} parent=1 // loop_pre_header
      _
    $region3: #{sage_conv.1} parent=1 // loop_header
      %s12 = sphi 0, %s16
      %p13 = scmp.ge.s32.totalorder %s12, 6
      %s19 = sphi 0, %s31
      %s20 = sphi 0, %s27
      %s21 = sphi 0, %s19
      %s22 = sphi 0, %s20
      %s23 = sphi 0, %s21
      %s24 = sphi 0, %s22
      %s36 = sphi 0, %s38
      %s39 = sphi 0, %s36
      %s40 = sphi 0, %s39
      %s56 = sphi 0, %s40
      %s62 = sphi 0, %s64
      %s65 = sphi 0, %s62
      %s66 = sphi 0, %s65
      %s82 = sphi 0, %s66
      %s88 = sphi 0, %s90
      %s91 = sphi 0, %s88
      %s92 = sphi 0, %s91
      %s108 = sphi 0, %s92
      %s112 = sphi 0, %s112
      %s114 = sphi 0, %s112
      %s115 = sphi 0, %s114
      %s129 = sphi 0, %s115
      %s133 = sphi 0, %s133
      %s135 = sphi 0, %s133
      %s136 = sphi 0, %s135
      %s150 = sphi 0, %s136
      %s154 = sphi 0, %s154
      %s156 = sphi 0, %s154
      %s157 = sphi 0, %s156
      %s171 = sphi 0, %s157
      %s177 = sphi 0, %s179
      %s180 = sphi 0, %s177
      %s181 = sphi 0, %s180
      %s197 = sphi 0, %s181
    $region4: #{sage_conv.1} parent=1 // loop_header_branch
      %15 = sbr.rel (%p13) target = $region8
    $region5: #{sage_conv.1} parent=1 // loop_body
      %s17 = ssub.s32 %s12, 1
      %s18 = ssub.s32 %s12, 2
      %s25 = sadd.s32 1, %s20
      %p26 = scmp.ge.s32.totalorder %s25, 2
      %s27 = scalar_select %p26, 0, %s25
      %s28 = sadd.s32 1, %s19
      %s29 = scalar_select %p26, %s28, %s19
      %p30 = scmp.ge.s32.totalorder %s29, 2
      %s31 = scalar_select %p30, 0, %s29
      %s32 = ssub.s32 %s19, %s31
      %s33 = ssub.s32 %s20, %s27
      %s34 = sor.u32 %s32, %s33
      %p35 = scmp.eq.s32.totalorder %s34, 0
      %s37 = sadd.s32 %s36, 1
      %s38 = scalar_select %p35, %s36, %s37
      %p41 = pneg %p35
      %p42 = scmp.eq.s32.totalorder %s12, 3
      %p43 = por %p41, %p42
      %p44 = scmp.ne.s32.totalorder %s36, %s39
      %p45 = scmp.eq.s32.totalorder %s12, 0
      %p46 = por %p44, %p45
      %p47 = scmp.ne.s32.totalorder %s36, %s39
      %p48 = scmp.eq.s32.totalorder %s17, 3
      %p49 = por %p47, %p48
      %p50 = scmp.ne.s32.totalorder %s39, %s40
      %p51 = scmp.eq.s32.totalorder %s17, 0
      %p52 = por %p50, %p51
      %p53 = scmp.ne.s32.totalorder %s39, %s40
      %p54 = scmp.eq.s32.totalorder %s18, 3
      %p55 = por %p53, %p54
      %p57 = scmp.ne.s32.totalorder %s40, %s56
      %p58 = scmp.eq.s32.totalorder %s18, 0
      %p59 = por %p57, %p58
      %s60 = ssub.s32 %s20, %s27
      %p61 = scmp.eq.s32.totalorder %s60, 0
      %s63 = sadd.s32 %s62, 1
      %s64 = scalar_select %p61, %s62, %s63
      %p67 = pneg %p61
      %p68 = scmp.eq.s32.totalorder %s12, 3
      %p69 = por %p67, %p68
      %p70 = scmp.ne.s32.totalorder %s62, %s65
      %p71 = scmp.eq.s32.totalorder %s12, 0
      %p72 = por %p70, %p71
      %p73 = scmp.ne.s32.totalorder %s62, %s65
      %p74 = scmp.eq.s32.totalorder %s17, 3
      %p75 = por %p73, %p74
      %p76 = scmp.ne.s32.totalorder %s65, %s66
      %p77 = scmp.eq.s32.totalorder %s17, 0
      %p78 = por %p76, %p77
      %p79 = scmp.ne.s32.totalorder %s65, %s66
      %p80 = scmp.eq.s32.totalorder %s18, 3
      %p81 = por %p79, %p80
      %p83 = scmp.ne.s32.totalorder %s66, %s82
      %p84 = scmp.eq.s32.totalorder %s18, 0
      %p85 = por %p83, %p84
      %s86 = ssub.s32 %s19, %s31
      %p87 = scmp.eq.s32.totalorder %s86, 0
      %s89 = sadd.s32 %s88, 1
      %s90 = scalar_select %p87, %s88, %s89
      %p93 = pneg %p87
      %p94 = scmp.eq.s32.totalorder %s12, 3
      %p95 = por %p93, %p94
      %p96 = scmp.ne.s32.totalorder %s88, %s91
      %p97 = scmp.eq.s32.totalorder %s12, 0
      %p98 = por %p96, %p97
      %p99 = scmp.ne.s32.totalorder %s88, %s91
      %p100 = scmp.eq.s32.totalorder %s17, 3
      %p101 = por %p99, %p100
      %p102 = scmp.ne.s32.totalorder %s91, %s92
      %p103 = scmp.eq.s32.totalorder %s17, 0
      %p104 = por %p102, %p103
      %p105 = scmp.ne.s32.totalorder %s91, %s92
      %p106 = scmp.eq.s32.totalorder %s18, 3
      %p107 = por %p105, %p106
      %p109 = scmp.ne.s32.totalorder %s92, %s108
      %p110 = scmp.eq.s32.totalorder %s18, 0
      %p111 = por %p109, %p110
      %s113 = sadd.s32 %s112, 1
      %p116 = scmp.eq.s32.totalorder %s12, 3
      %p117 = scmp.ne.s32.totalorder %s112, %s114
      %p118 = scmp.eq.s32.totalorder %s12, 0
      %p119 = por %p117, %p118
      %p120 = scmp.ne.s32.totalorder %s112, %s114
      %p121 = scmp.eq.s32.totalorder %s17, 3
      %p122 = por %p120, %p121
      %p123 = scmp.ne.s32.totalorder %s114, %s115
      %p124 = scmp.eq.s32.totalorder %s17, 0
      %p125 = por %p123, %p124
      %p126 = scmp.ne.s32.totalorder %s114, %s115
      %p127 = scmp.eq.s32.totalorder %s18, 3
      %p128 = por %p126, %p127
      %p130 = scmp.ne.s32.totalorder %s115, %s129
      %p131 = scmp.eq.s32.totalorder %s18, 0
      %p132 = por %p130, %p131
      %s134 = sadd.s32 %s133, 1
      %p137 = scmp.eq.s32.totalorder %s12, 3
      %p138 = scmp.ne.s32.totalorder %s133, %s135
      %p139 = scmp.eq.s32.totalorder %s12, 0
      %p140 = por %p138, %p139
      %p141 = scmp.ne.s32.totalorder %s133, %s135
      %p142 = scmp.eq.s32.totalorder %s17, 3
      %p143 = por %p141, %p142
      %p144 = scmp.ne.s32.totalorder %s135, %s136
      %p145 = scmp.eq.s32.totalorder %s17, 0
      %p146 = por %p144, %p145
      %p147 = scmp.ne.s32.totalorder %s135, %s136
      %p148 = scmp.eq.s32.totalorder %s18, 3
      %p149 = por %p147, %p148
      %p151 = scmp.ne.s32.totalorder %s136, %s150
      %p152 = scmp.eq.s32.totalorder %s18, 0
      %p153 = por %p151, %p152
      %s155 = sadd.s32 %s154, 1
      %p158 = scmp.eq.s32.totalorder %s12, 3
      %p159 = scmp.ne.s32.totalorder %s154, %s156
      %p160 = scmp.eq.s32.totalorder %s12, 0
      %p161 = por %p159, %p160
      %p162 = scmp.ne.s32.totalorder %s154, %s156
      %p163 = scmp.eq.s32.totalorder %s17, 3
      %p164 = por %p162, %p163
      %p165 = scmp.ne.s32.totalorder %s156, %s157
      %p166 = scmp.eq.s32.totalorder %s17, 0
      %p167 = por %p165, %p166
      %p168 = scmp.ne.s32.totalorder %s156, %s157
      %p169 = scmp.eq.s32.totalorder %s18, 3
      %p170 = por %p168, %p169
      %p172 = scmp.ne.s32.totalorder %s157, %s171
      %p173 = scmp.eq.s32.totalorder %s18, 0
      %p174 = por %p172, %p173
      %s175 = ssub.s32 %s19, %s31
      %p176 = scmp.eq.s32.totalorder %s175, 0
      %s178 = sadd.s32 %s177, 1
      %s179 = scalar_select %p176, %s177, %s178
      %p182 = pneg %p176
      %p183 = scmp.eq.s32.totalorder %s12, 3
      %p184 = por %p182, %p183
      %p185 = scmp.ne.s32.totalorder %s177, %s180
      %p186 = scmp.eq.s32.totalorder %s12, 0
      %p187 = por %p185, %p186
      %p188 = scmp.ne.s32.totalorder %s177, %s180
      %p189 = scmp.eq.s32.totalorder %s17, 3
      %p190 = por %p188, %p189
      %p191 = scmp.ne.s32.totalorder %s180, %s181
      %p192 = scmp.eq.s32.totalorder %s17, 0
      %p193 = por %p191, %p192
      %p194 = scmp.ne.s32.totalorder %s180, %s181
      %p195 = scmp.eq.s32.totalorder %s18, 3
      %p196 = por %p194, %p195
      %p198 = scmp.ne.s32.totalorder %s181, %s197
      %p199 = scmp.eq.s32.totalorder %s18, 0
      %p200 = por %p198, %p199
      %p201 = scmp.le.s32.totalorder 1, %s12
      %p202 = scmp.lt.s32.totalorder %s12, 5
      %p203 = pnand %p201, %p202
      %p204 = pneg %p203
      // Predicated region
      $region9: #{sage_conv.1} parent=5 // pred_check
        _
      $region10: #{sage_conv.1} parent=5 // pred_check_branch
        %206 = sbr.rel (%p203) target = $region12
      $region11: #{sage_conv.1} parent=5 // pred_region
        %s207 = ssub.s32 %s12, 1
        // Predicated region
        $region13: #{sage_conv.1} parent=11 // pred_check
          %p208 = pneg %p125
        $region14: #{sage_conv.1} parent=11 // pred_check_branch
          %210 = sbr.rel (%p208) target = $region16
        $region15: #{sage_conv.1} parent=11 // pred_region
          _
        $region16: #{sage_conv.1} parent=11 // pred_fallthru
          _
        // Predicated region
        $region17: #{sage_conv.1} parent=11 // pred_check
          %p211 = pneg %p146
        $region18: #{sage_conv.1} parent=11 // pred_check_branch
          %213 = sbr.rel (%p211) target = $region20
        $region19: #{sage_conv.1} parent=11 // pred_region
          _
        $region20: #{sage_conv.1} parent=11 // pred_fallthru
          _
        // Predicated region
        $region21: #{sage_conv.1} parent=11 // pred_check
          %p214 = pneg %p167
        $region22: #{sage_conv.1} parent=11 // pred_check_branch
          %216 = sbr.rel (%p214) target = $region24
        $region23: #{sage_conv.1} parent=11 // pred_region
          _
        $region24: #{sage_conv.1} parent=11 // pred_fallthru
          _
      $region12: #{sage_conv.1} parent=5 // pred_fallthru
        _
      %p217 = scmp.lt.s32.totalorder %s12, 4
      // Predicated region
      $region25: #{sage_conv.1} parent=5 // pred_check
        %p218 = pneg %p217
      $region26: #{sage_conv.1} parent=5 // pred_check_branch
        %220 = sbr.rel (%p218) target = $region28
      $region27: #{sage_conv.1} parent=5 // pred_region
        // Predicated region
        $region29: #{sage_conv.1} parent=27 // pred_check
          %p221 = pneg %p46
        $region30: #{sage_conv.1} parent=27 // pred_check_branch
          %223 = sbr.rel (%p221) target = $region32
        $region31: #{sage_conv.1} parent=27 // pred_region
          %s224 = sand.u32 %s36, 1
          %s225 = sand.u32 %s36, 1
          %s226 = smul.addr %s225, 128
          %s227 = scalar_lea.vmem [#allocation3], %s226
          %s228 = smul.u32 8, %s19
          %s229 = smul.u32 2, %s20
          %s230 = smul.addr %s228, 4
          %s231 = sadd.s32 %s229, %s230
          %s232 = smul.addr %s231, 8
          %s233 = scalar_lea.vmem %s0, %s232
          // Predicated region
          $region33: #{sage_conv.1} parent=31 // pred_check
            _
          $region34: #{sage_conv.1} parent=31 // pred_check_branch
            %235 = sbr.rel (0) target = $region36
          $region35: #{sage_conv.1} parent=31 // pred_region
            // Predicated region
            $region37: #{sage_conv.1} parent=35 // pred_check
              _
            $region38: #{sage_conv.1} parent=35 // pred_check_branch
              %237 = sbr.rel (0) target = $region40
            $region39: #{sage_conv.1} parent=35 // pred_region
              loop: start=0, step=1, limit=1
              $region41: #{sage_conv.1} parent=39 // loop_pre_header
                _
              $region42: #{sage_conv.1} parent=39 // loop_header
                %s239 = sphi 0, %s243
                %p240 = scmp.ge.s32.totalorder %s239, 1
                %s244 = sphi %s233, %s233
                %s245 = sphi %s227, %s227
              $region43: #{sage_conv.1} parent=39 // loop_header_branch
                %242 = sbr.rel (%p240) target = $region47
              $region44: #{sage_conv.1} parent=39 // loop_body
                %v246 = vld [vmem:[%s244] sm:$0xff]
                %247 = vst [vmem:[%s245] sm:$0xff] %v246
                %v248 = vld [vmem:[%s244 + $0x8] sm:$0xff]
                %249 = vst [vmem:[%s245 + $0x8] sm:$0xff] %v248
                %v250 = vld [vmem:[%s244 + $0x20] sm:$0xff]
                %251 = vst [vmem:[%s245 + $0x10] sm:$0xff] %v250
                %v252 = vld [vmem:[%s244 + $0x28] sm:$0xff]
                %253 = vst [vmem:[%s245 + $0x18] sm:$0xff] %v252
                %v254 = vld [vmem:[%s244 + $0x40] sm:$0xff]
                %255 = vst [vmem:[%s245 + $0x20] sm:$0xff] %v254
                %v256 = vld [vmem:[%s244 + $0x48] sm:$0xff]
                %257 = vst [vmem:[%s245 + $0x28] sm:$0xff] %v256
                %v258 = vld [vmem:[%s244 + $0x60] sm:$0xff]
                %259 = vst [vmem:[%s245 + $0x30] sm:$0xff] %v258
                %v260 = vld [vmem:[%s244 + $0x68] sm:$0xff]
                %261 = vst [vmem:[%s245 + $0x38] sm:$0xff] %v260
                %v262 = vld [vmem:[%s244 + $0x80] sm:$0xff]
                %263 = vst [vmem:[%s245 + $0x40] sm:$0xff] %v262
                %v264 = vld [vmem:[%s244 + $0x88] sm:$0xff]
                %265 = vst [vmem:[%s245 + $0x48] sm:$0xff] %v264
                %v266 = vld [vmem:[%s244 + $0xa0] sm:$0xff]
                %267 = vst [vmem:[%s245 + $0x50] sm:$0xff] %v266
                %v268 = vld [vmem:[%s244 + $0xa8] sm:$0xff]
                %269 = vst [vmem:[%s245 + $0x58] sm:$0xff] %v268
                %v270 = vld [vmem:[%s244 + $0xc0] sm:$0xff]
                %271 = vst [vmem:[%s245 + $0x60] sm:$0xff] %v270
                %v272 = vld [vmem:[%s244 + $0xc8] sm:$0xff]
                %273 = vst [vmem:[%s245 + $0x68] sm:$0xff] %v272
                %v274 = vld [vmem:[%s244 + $0xe0] sm:$0xff]
                %275 = vst [vmem:[%s245 + $0x70] sm:$0xff] %v274
                %v276 = vld [vmem:[%s244 + $0xe8] sm:$0xff]
                %277 = vst [vmem:[%s245 + $0x78] sm:$0xff] %v276
              $region45: #{sage_conv.1} parent=39 // loop_footer
                %s243 = sadd.s32 1, %s239
              $region46: #{sage_conv.1} parent=39 // loop_footer_branch
                %238 = sbr.rel target = $region42
              $region47: #{sage_conv.1} parent=39 // loop_exit
                _
            $region40: #{sage_conv.1} parent=35 // pred_fallthru
              _
            // Predicated region
            $region48: #{sage_conv.1} parent=35 // pred_check
              _
            $region49: #{sage_conv.1} parent=35 // pred_check_branch
              %279 = sbr.rel target = $region51
            $region50: #{sage_conv.1} parent=35 // pred_region
              _
            $region51: #{sage_conv.1} parent=35 // pred_fallthru
              _
          $region36: #{sage_conv.1} parent=31 // pred_fallthru
            _
          %280 = vnop
        $region32: #{sage_conv.1} parent=27 // pred_fallthru
          _
        // Predicated region
        $region52: #{sage_conv.1} parent=27 // pred_check
          %p281 = pneg %p72
        $region53: #{sage_conv.1} parent=27 // pred_check_branch
          %283 = sbr.rel (%p281) target = $region55
        $region54: #{sage_conv.1} parent=27 // pred_region
          %s284 = smul.u32 32, %s20
          %p285 = scmp.lt.s32.totalorder %s284, 63
          %s286 = scalar_select %p285, %s284, 63
          %s287 = smul.addr %s286, 4
          %s288 = scalar_lea.vmem %s1, %s287
          %s289 = smul.u32 32, %s20
        $region55: #{sage_conv.1} parent=27 // pred_fallthru
          _
        // Predicated region
        $region56: #{sage_conv.1} parent=27 // pred_check
          %p290 = pneg %p98
        $region57: #{sage_conv.1} parent=27 // pred_check_branch
          %292 = sbr.rel (%p290) target = $region59
        $region58: #{sage_conv.1} parent=27 // pred_region
          %s293 = smul.u32 32, %s19
          %p294 = scmp.lt.s32.totalorder %s293, 63
          %s295 = scalar_select %p294, %s293, 63
          %s296 = smul.addr %s295, 4
          %s297 = scalar_lea.vmem %s2, %s296
          %s298 = smul.u32 32, %s19
        $region59: #{sage_conv.1} parent=27 // pred_fallthru
          _
      $region28: #{sage_conv.1} parent=5 // pred_fallthru
        _
      %p299 = scmp.le.s32.totalorder 1, %s12
      %p300 = scmp.lt.s32.totalorder %s12, 5
      %p301 = pnand %p299, %p300
      %p302 = pneg %p301
      // Predicated region
      $region60: #{sage_conv.1} parent=5 // pred_check
        _
      $region61: #{sage_conv.1} parent=5 // pred_check_branch
        %304 = sbr.rel (%p301) target = $region63
      $region62: #{sage_conv.1} parent=5 // pred_region
        %s305 = ssub.s32 %s12, 1
        %s306 = sand.u32 %s39, 1
        %s307 = sand.u32 %s39, 1
        %s308 = smul.addr %s307, 128
        %s309 = scalar_lea.vmem [#allocation3], %s308
        // Predicated region
        $region64: #{sage_conv.1} parent=62 // pred_check
          %p310 = pneg %p52
        $region65: #{sage_conv.1} parent=62 // pred_check_branch
          %312 = sbr.rel (%p310) target = $region67
        $region66: #{sage_conv.1} parent=62 // pred_region
          _
        $region67: #{sage_conv.1} parent=62 // pred_fallthru
          _
        %s313 = sand.u32 %s39, 1
        %s314 = sand.u32 %s39, 1
        %s315 = smul.addr %s314, 128
        %s316 = scalar_lea.vmem [#allocation3], %s315
        %p317 = pneg %p52
        %p318 = pneg %p49
        %s319 = smul.u32 32, %s22
        %p320 = scmp.lt.s32.totalorder %s319, 63
        %s321 = scalar_select %p320, %s319, 63
        %s322 = smul.addr %s321, 4
        %s323 = scalar_lea.vmem %s1, %s322
        %p324 = pneg %p78
        %p325 = pneg %p75
        %s326 = smul.u32 32, %s21
        %p327 = scmp.lt.s32.totalorder %s326, 63
        %s328 = scalar_select %p327, %s326, 63
        %s329 = smul.addr %s328, 4
        %s330 = scalar_lea.vmem %s2, %s329
        %p331 = pneg %p104
        %p332 = pneg %p101
        %p333 = pneg %p125
        %p334 = pneg %p122
        %p335 = pneg %p146
        %p336 = pneg %p143
        %p337 = pneg %p167
        %p338 = pneg %p164
        %p339 = pneg %p193
        %p340 = pneg %p190
        %s341 = smul.u32 32, %s21
        %p342 = scmp.lt.s32.totalorder %s341, 63
        %s343 = scalar_select %p342, %s341, 63
        %s344 = smul.addr %s343, 8
        %s345 = scalar_lea.vmem %s6, %s344
        %s346 = smul.u32 8, %s21
        %s347 = smul.u32 2, %s22
        %s348 = smul.u32 32, %s22
        %p349 = scmp.lt.s32.totalorder %s348, 63
        %s350 = scalar_select %p349, %s348, 63
        %s351 = smul.addr %s350, 4
        %s352 = scalar_lea.vmem %s1, %s351
        %s353 = smul.u32 32, %s22
        %s354 = smul.u32 32, %s21
        %p355 = scmp.lt.s32.totalorder %s354, 63
        %s356 = scalar_select %p355, %s354, 63
        %s357 = smul.addr %s356, 4
        %s358 = scalar_lea.vmem %s2, %s357
        %s359 = smul.u32 32, %s21
        %s360 = smul.u32 32, %s21
        %p361 = scmp.lt.s32.totalorder %s360, 63
        %s362 = scalar_select %p361, %s360, 63
        %s363 = smul.addr %s362, 8
        %s364 = scalar_lea.vmem %s6, %s363
        %s365 = smul.u32 32, %s21
        %p367 = scmp.eq.s32.totalorder %s22, 0
        // Predicated region
        $region68: #{sage_conv.1} parent=62 // pred_check
          %p368 = pneg %p367
        $region69: #{sage_conv.1} parent=62 // pred_check_branch
          %370 = sbr.rel (%p368) target = $region71
        $region70: #{sage_conv.1} parent=62 // pred_region
          %371 = vst [vmem:[#allocation2] sm:$0xff] 0.0
          %372 = vst [vmem:[#allocation2 + $0x8] sm:$0xff] 0.0
          %373 = vst [vmem:[#allocation2 + $0x10] sm:$0xff] 0.0
          %374 = vst [vmem:[#allocation2 + $0x18] sm:$0xff] 0.0
          %375 = vst [vmem:[#allocation2 + $0x20] sm:$0xff] 0.0
          %376 = vst [vmem:[#allocation2 + $0x28] sm:$0xff] 0.0
          %377 = vst [vmem:[#allocation2 + $0x30] sm:$0xff] 0.0
          %378 = vst [vmem:[#allocation2 + $0x38] sm:$0xff] 0.0
          %379 = vst [vmem:[#allocation2 + $0x40] sm:$0xff] 0.0
          %380 = vst [vmem:[#allocation2 + $0x48] sm:$0xff] 0.0
          %381 = vst [vmem:[#allocation2 + $0x50] sm:$0xff] 0.0
          %382 = vst [vmem:[#allocation2 + $0x58] sm:$0xff] 0.0
          %383 = vst [vmem:[#allocation2 + $0x60] sm:$0xff] 0.0
          %384 = vst [vmem:[#allocation2 + $0x68] sm:$0xff] 0.0
          %385 = vst [vmem:[#allocation2 + $0x70] sm:$0xff] 0.0
          %386 = vst [vmem:[#allocation2 + $0x78] sm:$0xff] 0.0
          %387 = vst [vmem:[#allocation2 + $0x80] sm:$0xff] 0.0
          %388 = vst [vmem:[#allocation2 + $0x88] sm:$0xff] 0.0
          %389 = vst [vmem:[#allocation2 + $0x90] sm:$0xff] 0.0
          %390 = vst [vmem:[#allocation2 + $0x98] sm:$0xff] 0.0
          %391 = vst [vmem:[#allocation2 + $0xa0] sm:$0xff] 0.0
          %392 = vst [vmem:[#allocation2 + $0xa8] sm:$0xff] 0.0
          %393 = vst [vmem:[#allocation2 + $0xb0] sm:$0xff] 0.0
          %394 = vst [vmem:[#allocation2 + $0xb8] sm:$0xff] 0.0
          %395 = vst [vmem:[#allocation2 + $0xc0] sm:$0xff] 0.0
          %396 = vst [vmem:[#allocation2 + $0xc8] sm:$0xff] 0.0
          %397 = vst [vmem:[#allocation2 + $0xd0] sm:$0xff] 0.0
          %398 = vst [vmem:[#allocation2 + $0xd8] sm:$0xff] 0.0
          %399 = vst [vmem:[#allocation2 + $0xe0] sm:$0xff] 0.0
          %400 = vst [vmem:[#allocation2 + $0xe8] sm:$0xff] 0.0
          %401 = vst [vmem:[#allocation2 + $0xf0] sm:$0xff] 0.0
          %402 = vst [vmem:[#allocation2 + $0xf8] sm:$0xff] 0.0
        $region71: #{sage_conv.1} parent=62 // pred_fallthru
          _
        %v403 = vld [vmem:[%s309] sm:$0xff]
        %v404 = vld [vmem:[%s309 + $0x8] sm:$0xff]
        %v405 = vld [vmem:[%s309 + $0x10] sm:$0xff]
        %v406 = vld [vmem:[%s309 + $0x18] sm:$0xff]
        %v407 = vld [vmem:[%s309 + $0x20] sm:$0xff]
        %v408 = vld [vmem:[%s309 + $0x28] sm:$0xff]
        %v409 = vld [vmem:[%s309 + $0x30] sm:$0xff]
        %v410 = vld [vmem:[%s309 + $0x38] sm:$0xff]
        %v411 = vld [vmem:[%s309 + $0x40] sm:$0xff]
        %v412 = vld [vmem:[%s309 + $0x48] sm:$0xff]
        %v413 = vld [vmem:[%s309 + $0x50] sm:$0xff]
        %v414 = vld [vmem:[%s309 + $0x58] sm:$0xff]
        %v415 = vld [vmem:[%s309 + $0x60] sm:$0xff]
        %v416 = vld [vmem:[%s309 + $0x68] sm:$0xff]
        %v417 = vld [vmem:[%s309 + $0x70] sm:$0xff]
        %v418 = vld [vmem:[%s309 + $0x78] sm:$0xff]
        %v419 = vunpack.c.l.s8.bf16 %v403
        %v420 = vunpack.c.l.s8.bf16 %v404
        %v421 = vunpack.c.h.s8.bf16 %v403
        %v422 = vunpack.c.h.s8.bf16 %v404
        %v423 = vunpack.c.l.s8.bf16 %v405
        %v424 = vunpack.c.l.s8.bf16 %v406
        %v425 = vunpack.c.h.s8.bf16 %v405
        %v426 = vunpack.c.h.s8.bf16 %v406
        %v427 = vunpack.c.l.s8.bf16 %v407
        %v428 = vunpack.c.l.s8.bf16 %v408
        %v429 = vunpack.c.h.s8.bf16 %v407
        %v430 = vunpack.c.h.s8.bf16 %v408
        %v431 = vunpack.c.l.s8.bf16 %v409
        %v432 = vunpack.c.l.s8.bf16 %v410
        %v433 = vunpack.c.h.s8.bf16 %v409
        %v434 = vunpack.c.h.s8.bf16 %v410
        %v435 = vunpack.c.l.s8.bf16 %v411
        %v436 = vunpack.c.l.s8.bf16 %v412
        %v437 = vunpack.c.h.s8.bf16 %v411
        %v438 = vunpack.c.h.s8.bf16 %v412
        %v439 = vunpack.c.l.s8.bf16 %v413
        %v440 = vunpack.c.l.s8.bf16 %v414
        %v441 = vunpack.c.h.s8.bf16 %v413
        %v442 = vunpack.c.h.s8.bf16 %v414
        %v443 = vunpack.c.l.s8.bf16 %v415
        %v444 = vunpack.c.l.s8.bf16 %v416
        %v445 = vunpack.c.h.s8.bf16 %v415
        %v446 = vunpack.c.h.s8.bf16 %v416
        %v447 = vunpack.c.l.s8.bf16 %v417
        %v448 = vunpack.c.l.s8.bf16 %v418
        %v449 = vunpack.c.h.s8.bf16 %v417
        %v450 = vunpack.c.h.s8.bf16 %v418
        %v451 = vld [vmem:[#allocation2] sm:$0xff]
        %v452 = vld [vmem:[#allocation2 + $0x8] sm:$0xff]
        %v453 = vld [vmem:[#allocation2 + $0x10] sm:$0xff]
        %v454 = vld [vmem:[#allocation2 + $0x18] sm:$0xff]
        %v455 = vld [vmem:[#allocation2 + $0x20] sm:$0xff]
        %v456 = vld [vmem:[#allocation2 + $0x28] sm:$0xff]
        %v457 = vld [vmem:[#allocation2 + $0x30] sm:$0xff]
        %v458 = vld [vmem:[#allocation2 + $0x38] sm:$0xff]
        %v459 = vld [vmem:[#allocation2 + $0x40] sm:$0xff]
        %v460 = vld [vmem:[#allocation2 + $0x48] sm:$0xff]
        %v461 = vld [vmem:[#allocation2 + $0x50] sm:$0xff]
        %v462 = vld [vmem:[#allocation2 + $0x58] sm:$0xff]
        %v463 = vld [vmem:[#allocation2 + $0x60] sm:$0xff]
        %v464 = vld [vmem:[#allocation2 + $0x68] sm:$0xff]
        %v465 = vld [vmem:[#allocation2 + $0x70] sm:$0xff]
        %v466 = vld [vmem:[#allocation2 + $0x78] sm:$0xff]
        %v467 = vld [vmem:[#allocation2 + $0x80] sm:$0xff]
        %v468 = vld [vmem:[#allocation2 + $0x88] sm:$0xff]
        %v469 = vld [vmem:[#allocation2 + $0x90] sm:$0xff]
        %v470 = vld [vmem:[#allocation2 + $0x98] sm:$0xff]
        %v471 = vld [vmem:[#allocation2 + $0xa0] sm:$0xff]
        %v472 = vld [vmem:[#allocation2 + $0xa8] sm:$0xff]
        %v473 = vld [vmem:[#allocation2 + $0xb0] sm:$0xff]
        %v474 = vld [vmem:[#allocation2 + $0xb8] sm:$0xff]
        %v475 = vld [vmem:[#allocation2 + $0xc0] sm:$0xff]
        %v476 = vld [vmem:[#allocation2 + $0xc8] sm:$0xff]
        %v477 = vld [vmem:[#allocation2 + $0xd0] sm:$0xff]
        %v478 = vld [vmem:[#allocation2 + $0xd8] sm:$0xff]
        %v479 = vld [vmem:[#allocation2 + $0xe0] sm:$0xff]
        %v480 = vld [vmem:[#allocation2 + $0xe8] sm:$0xff]
        %v481 = vld [vmem:[#allocation2 + $0xf0] sm:$0xff]
        %v482 = vld [vmem:[#allocation2 + $0xf8] sm:$0xff]
        %v483 = vld [vmem:[%s352] sm:$0xf]
        %v484 = vld [vmem:[%s352 + $0x4] sm:$0xf]
        %v485 = vld [vmem:[%s352 + $0x8] sm:$0xf]
        %v486 = vld [vmem:[%s352 + $0xc] sm:$0xf]
        %v487 = vld [vmem:[%s352 + $0x10] sm:$0xf]
        %v488 = vld [vmem:[%s352 + $0x14] sm:$0xf]
        %v489 = vld [vmem:[%s352 + $0x18] sm:$0xf]
        %v490 = vld [vmem:[%s352 + $0x1c] sm:$0xf]
        %v491 = vld [vmem:[%s352 + $0x20] sm:$0xf]
        %v492 = vld [vmem:[%s352 + $0x24] sm:$0xf]
        %v493 = vld [vmem:[%s352 + $0x28] sm:$0xf]
        %v494 = vld [vmem:[%s352 + $0x2c] sm:$0xf]
        %v495 = vld [vmem:[%s352 + $0x30] sm:$0xf]
        %v496 = vld [vmem:[%s352 + $0x34] sm:$0xf]
        %v497 = vld [vmem:[%s352 + $0x38] sm:$0xf]
        %v498 = vld [vmem:[%s352 + $0x3c] sm:$0xf]
        %v499 = vld [vmem:[%s352 + $0x40] sm:$0xf]
        %v500 = vld [vmem:[%s352 + $0x44] sm:$0xf]
        %v501 = vld [vmem:[%s352 + $0x48] sm:$0xf]
        %v502 = vld [vmem:[%s352 + $0x4c] sm:$0xf]
        %v503 = vld [vmem:[%s352 + $0x50] sm:$0xf]
        %v504 = vld [vmem:[%s352 + $0x54] sm:$0xf]
        %v505 = vld [vmem:[%s352 + $0x58] sm:$0xf]
        %v506 = vld [vmem:[%s352 + $0x5c] sm:$0xf]
        %v507 = vld [vmem:[%s352 + $0x60] sm:$0xf]
        %v508 = vld [vmem:[%s352 + $0x64] sm:$0xf]
        %v509 = vld [vmem:[%s352 + $0x68] sm:$0xf]
        %v510 = vld [vmem:[%s352 + $0x6c] sm:$0xf]
        %v511 = vld [vmem:[%s352 + $0x70] sm:$0xf]
        %v512 = vld [vmem:[%s352 + $0x74] sm:$0xf]
        %v513 = vld [vmem:[%s352 + $0x78] sm:$0xf]
        %v514 = vld [vmem:[%s352 + $0x7c] sm:$0xf]
        %v547 = vunpack.c.l.b16 %v483
        %v548 = vunpack.c.l.b16 %v484
        %v549 = vunpack.c.l.b16 %v485
        %v550 = vunpack.c.l.b16 %v486
        %v551 = vunpack.c.l.b16 %v487
        %v552 = vunpack.c.l.b16 %v488
        %v553 = vunpack.c.l.b16 %v489
        %v554 = vunpack.c.l.b16 %v490
        %v555 = vunpack.c.l.b16 %v491
        %v556 = vunpack.c.l.b16 %v492
        %v557 = vunpack.c.l.b16 %v493
        %v558 = vunpack.c.l.b16 %v494
        %v559 = vunpack.c.l.b16 %v495
        %v560 = vunpack.c.l.b16 %v496
        %v561 = vunpack.c.l.b16 %v497
        %v562 = vunpack.c.l.b16 %v498
        %v563 = vunpack.c.l.b16 %v499
        %v564 = vunpack.c.l.b16 %v500
        %v565 = vunpack.c.l.b16 %v501
        %v566 = vunpack.c.l.b16 %v502
        %v567 = vunpack.c.l.b16 %v503
        %v568 = vunpack.c.l.b16 %v504
        %v569 = vunpack.c.l.b16 %v505
        %v570 = vunpack.c.l.b16 %v506
        %v571 = vunpack.c.l.b16 %v507
        %v572 = vunpack.c.l.b16 %v508
        %v573 = vunpack.c.l.b16 %v509
        %v574 = vunpack.c.l.b16 %v510
        %v575 = vunpack.c.l.b16 %v511
        %v576 = vunpack.c.l.b16 %v512
        %v577 = vunpack.c.l.b16 %v513
        %v578 = vunpack.c.l.b16 %v514
        %v579 = vpack.c.b16 %v548, %v547
        %v580 = vpack.c.b16 %v550, %v549
        %v581 = vpack.c.b16 %v552, %v551
        %v582 = vpack.c.b16 %v554, %v553
        %v583 = vpack.c.b16 %v556, %v555
        %v584 = vpack.c.b16 %v558, %v557
        %v585 = vpack.c.b16 %v560, %v559
        %v586 = vpack.c.b16 %v562, %v561
        %v587 = vpack.c.b16 %v564, %v563
        %v588 = vpack.c.b16 %v566, %v565
        %v589 = vpack.c.b16 %v568, %v567
        %v590 = vpack.c.b16 %v570, %v569
        %v591 = vpack.c.b16 %v572, %v571
        %v592 = vpack.c.b16 %v574, %v573
        %v593 = vpack.c.b16 %v576, %v575
        %v594 = vpack.c.b16 %v578, %v577
        %611 = vmatprep.subr.bf16.mxu0 0
        %612 = vmatpush1.bf16.msra.mxu0 %v579
        %613 = vmatprep.subr.bf16.mxu0 0
        %614 = vmatpush1.bf16.msra.mxu0 %v580
        %615 = vmatprep.subr.bf16.mxu0 0
        %616 = vmatpush1.bf16.msra.mxu0 %v581
        %617 = vmatprep.subr.bf16.mxu0 0
        %618 = vmatpush1.bf16.msra.mxu0 %v582
        %619 = vmatprep.subr.bf16.mxu0 0
        %620 = vmatpush1.bf16.msra.mxu0 %v583
        %621 = vmatprep.subr.bf16.mxu0 0
        %622 = vmatpush1.bf16.msra.mxu0 %v584
        %623 = vmatprep.subr.bf16.mxu0 0
        %624 = vmatpush1.bf16.msra.mxu0 %v585
        %625 = vmatprep.subr.bf16.mxu0 0
        %626 = vmatpush1.bf16.msra.mxu0 %v586
        %627 = vmatprep.subr.bf16.mxu0 0
        %628 = vmatpush1.bf16.msra.mxu0 %v587
        %629 = vmatprep.subr.bf16.mxu0 0
        %630 = vmatpush1.bf16.msra.mxu0 %v588
        %631 = vmatprep.subr.bf16.mxu0 0
        %632 = vmatpush1.bf16.msra.mxu0 %v589
        %633 = vmatprep.subr.bf16.mxu0 0
        %634 = vmatpush1.bf16.msra.mxu0 %v590
        %635 = vmatprep.subr.bf16.mxu0 0
        %636 = vmatpush1.bf16.msra.mxu0 %v591
        %637 = vmatprep.subr.bf16.mxu0 0
        %638 = vmatpush1.bf16.msra.mxu0 %v592
        %639 = vmatprep.subr.bf16.mxu0 0
        %640 = vmatpush1.bf16.msra.mxu0 %v593
        %641 = vmatprep.subr.bf16.mxu0 0
        %642 = vmatpush1.bf16.msra.mxu0 %v594
        %643 = vmatprep.mubr.bf16.mxu0 %v420
        %644 = vmatmul.mubr.bf16.gmra.mrb[0].mxu0 %v419
        %v645 = vpop.f32.mrb[0].mxu0
        %v646 = vadd.f32 0.0, %v645
        %v647 = vpop.f32.mrb[0].mxu0
        %v648 = vpop.f32.mrb[0].mxu0
        %v649 = vadd.f32 0.0, %v648
        %v650 = vpop.f32.mrb[0].mxu0
        %651 = vmatprep.mubr.bf16.mxu0 %v422
        %652 = vmatmul.mubr.bf16.gmra.mrb[0].mxu0 %v421
        %v653 = vpop.f32.mrb[0].mxu0
        %v654 = vadd.f32 0.0, %v653
        %v655 = vpop.f32.mrb[0].mxu0
        %v656 = vpop.f32.mrb[0].mxu0
        %v657 = vadd.f32 0.0, %v656
        %v658 = vpop.f32.mrb[0].mxu0
        %659 = vmatprep.mubr.bf16.mxu0 %v424
        %660 = vmatmul.mubr.bf16.gmra.mrb[0].mxu0 %v423
        %v661 = vpop.f32.mrb[0].mxu0
        %v662 = vadd.f32 0.0, %v661
        %v663 = vpop.f32.mrb[0].mxu0
        %v664 = vpop.f32.mrb[0].mxu0
        %v665 = vadd.f32 0.0, %v664
        %v666 = vpop.f32.mrb[0].mxu0
        %667 = vmatprep.mubr.bf16.mxu0 %v426
        %668 = vmatmul.mubr.bf16.gmra.mrb[0].mxu0 %v425
        %v669 = vpop.f32.mrb[0].mxu0
        %v670 = vadd.f32 0.0, %v669
        %v671 = vpop.f32.mrb[0].mxu0
        %v672 = vpop.f32.mrb[0].mxu0
        %v673 = vadd.f32 0.0, %v672
        %v674 = vpop.f32.mrb[0].mxu0
        %675 = vmatprep.mubr.bf16.mxu0 %v428
        %676 = vmatmul.mubr.bf16.gmra.mrb[0].mxu0 %v427
        %v677 = vpop.f32.mrb[0].mxu0
        %v678 = vadd.f32 0.0, %v677
        %v679 = vpop.f32.mrb[0].mxu0
        %v680 = vpop.f32.mrb[0].mxu0
        %v681 = vadd.f32 0.0, %v680
        %v682 = vpop.f32.mrb[0].mxu0
        %683 = vmatprep.mubr.bf16.mxu0 %v430
        %684 = vmatmul.mubr.bf16.gmra.mrb[0].mxu0 %v429
        %v685 = vpop.f32.mrb[0].mxu0
        %v686 = vadd.f32 0.0, %v685
        %v687 = vpop.f32.mrb[0].mxu0
        %v688 = vpop.f32.mrb[0].mxu0
        %v689 = vadd.f32 0.0, %v688
        %v690 = vpop.f32.mrb[0].mxu0
        %691 = vmatprep.mubr.bf16.mxu0 %v432
        %692 = vmatmul.mubr.bf16.gmra.mrb[0].mxu0 %v431
        %v693 = vpop.f32.mrb[0].mxu0
        %v694 = vadd.f32 0.0, %v693
        %v695 = vpop.f32.mrb[0].mxu0
        %v696 = vpop.f32.mrb[0].mxu0
        %v697 = vadd.f32 0.0, %v696
        %v698 = vpop.f32.mrb[0].mxu0
        %699 = vmatprep.mubr.bf16.mxu0 %v434
        %700 = vmatmul.mubr.bf16.gmra.mrb[0].mxu0 %v433
        %v701 = vpop.f32.mrb[0].mxu0
        %v702 = vadd.f32 0.0, %v701
        %v703 = vpop.f32.mrb[0].mxu0
        %v704 = vpop.f32.mrb[0].mxu0
        %v705 = vadd.f32 0.0, %v704
        %v706 = vpop.f32.mrb[0].mxu0
        %707 = vmatprep.mubr.bf16.mxu0 %v436
        %708 = vmatmul.mubr.bf16.gmra.mrb[0].mxu0 %v435
        %v709 = vpop.f32.mrb[0].mxu0
        %v710 = vadd.f32 0.0, %v709
        %v711 = vpop.f32.mrb[0].mxu0
        %v712 = vpop.f32.mrb[0].mxu0
        %v713 = vadd.f32 0.0, %v712
        %v714 = vpop.f32.mrb[0].mxu0
        %715 = vmatprep.mubr.bf16.mxu0 %v438
        %716 = vmatmul.mubr.bf16.gmra.mrb[0].mxu0 %v437
        %v717 = vpop.f32.mrb[0].mxu0
        %v718 = vadd.f32 0.0, %v717
        %v719 = vpop.f32.mrb[0].mxu0
        %v720 = vpop.f32.mrb[0].mxu0
        %v721 = vadd.f32 0.0, %v720
        %v722 = vpop.f32.mrb[0].mxu0
        %723 = vmatprep.mubr.bf16.mxu0 %v440
        %724 = vmatmul.mubr.bf16.gmra.mrb[0].mxu0 %v439
        %v725 = vpop.f32.mrb[0].mxu0
        %v726 = vadd.f32 0.0, %v725
        %v727 = vpop.f32.mrb[0].mxu0
        %v728 = vpop.f32.mrb[0].mxu0
        %v729 = vadd.f32 0.0, %v728
        %v730 = vpop.f32.mrb[0].mxu0
        %731 = vmatprep.mubr.bf16.mxu0 %v442
        %732 = vmatmul.mubr.bf16.gmra.mrb[0].mxu0 %v441
        %v733 = vpop.f32.mrb[0].mxu0
        %v734 = vadd.f32 0.0, %v733
        %v735 = vpop.f32.mrb[0].mxu0
        %v736 = vpop.f32.mrb[0].mxu0
        %v737 = vadd.f32 0.0, %v736
        %v738 = vpop.f32.mrb[0].mxu0
        %739 = vmatprep.mubr.bf16.mxu0 %v444
        %740 = vmatmul.mubr.bf16.gmra.mrb[0].mxu0 %v443
        %v741 = vpop.f32.mrb[0].mxu0
        %v742 = vadd.f32 0.0, %v741
        %v743 = vpop.f32.mrb[0].mxu0
        %v744 = vpop.f32.mrb[0].mxu0
        %v745 = vadd.f32 0.0, %v744
        %v746 = vpop.f32.mrb[0].mxu0
        %747 = vmatprep.mubr.bf16.mxu0 %v446
        %748 = vmatmul.mubr.bf16.gmra.mrb[0].mxu0 %v445
        %v749 = vpop.f32.mrb[0].mxu0
        %v750 = vadd.f32 0.0, %v749
        %v751 = vpop.f32.mrb[0].mxu0
        %v752 = vpop.f32.mrb[0].mxu0
        %v753 = vadd.f32 0.0, %v752
        %v754 = vpop.f32.mrb[0].mxu0
        %755 = vmatprep.mubr.bf16.mxu0 %v448
        %756 = vmatmul.mubr.bf16.gmra.mrb[0].mxu0 %v447
        %v757 = vpop.f32.mrb[0].mxu0
        %v758 = vadd.f32 0.0, %v757
        %v759 = vpop.f32.mrb[0].mxu0
        %v760 = vpop.f32.mrb[0].mxu0
        %v761 = vadd.f32 0.0, %v760
        %v762 = vpop.f32.mrb[0].mxu0
        %763 = vmatprep.mubr.bf16.mxu0 %v450
        %764 = vmatmul.mubr.bf16.gmra.mrb[0].mxu0 %v449
        %v765 = vpop.f32.mrb[0].mxu0
        %v766 = vadd.f32 0.0, %v765
        %v767 = vpop.f32.mrb[0].mxu0
        %v768 = vpop.f32.mrb[0].mxu0
        %v769 = vadd.f32 0.0, %v768
        %v770 = vpop.f32.mrb[0].mxu0
        %771 = vdwg.mxu0
        %v772 = vadd.f32 %v451, %v646
        %v773 = vadd.f32 %v452, %v649
        %v774 = vadd.f32 %v453, %v654
        %v775 = vadd.f32 %v454, %v657
        %v776 = vadd.f32 %v455, %v662
        %v777 = vadd.f32 %v456, %v665
        %v778 = vadd.f32 %v457, %v670
        %v779 = vadd.f32 %v458, %v673
        %v780 = vadd.f32 %v459, %v678
        %v781 = vadd.f32 %v460, %v681
        %v782 = vadd.f32 %v461, %v686
        %v783 = vadd.f32 %v462, %v689
        %v784 = vadd.f32 %v463, %v694
        %v785 = vadd.f32 %v464, %v697
        %v786 = vadd.f32 %v465, %v702
        %v787 = vadd.f32 %v466, %v705
        %v788 = vadd.f32 %v467, %v710
        %v789 = vadd.f32 %v468, %v713
        %v790 = vadd.f32 %v469, %v718
        %v791 = vadd.f32 %v470, %v721
        %v792 = vadd.f32 %v471, %v726
        %v793 = vadd.f32 %v472, %v729
        %v794 = vadd.f32 %v473, %v734
        %v795 = vadd.f32 %v474, %v737
        %v796 = vadd.f32 %v475, %v742
        %v797 = vadd.f32 %v476, %v745
        %v798 = vadd.f32 %v477, %v750
        %v799 = vadd.f32 %v478, %v753
        %v800 = vadd.f32 %v479, %v758
        %v801 = vadd.f32 %v480, %v761
        %v802 = vadd.f32 %v481, %v766
        %v803 = vadd.f32 %v482, %v769
        %804 = vst [vmem:[#allocation2] sm:$0xff] %v772
        %805 = vst [vmem:[#allocation2 + $0x8] sm:$0xff] %v773
        %806 = vst [vmem:[#allocation2 + $0x10] sm:$0xff] %v774
        %807 = vst [vmem:[#allocation2 + $0x18] sm:$0xff] %v775
        %808 = vst [vmem:[#allocation2 + $0x20] sm:$0xff] %v776
        %809 = vst [vmem:[#allocation2 + $0x28] sm:$0xff] %v777
        %810 = vst [vmem:[#allocation2 + $0x30] sm:$0xff] %v778
        %811 = vst [vmem:[#allocation2 + $0x38] sm:$0xff] %v779
        %812 = vst [vmem:[#allocation2 + $0x40] sm:$0xff] %v780
        %813 = vst [vmem:[#allocation2 + $0x48] sm:$0xff] %v781
        %814 = vst [vmem:[#allocation2 + $0x50] sm:$0xff] %v782
        %815 = vst [vmem:[#allocation2 + $0x58] sm:$0xff] %v783
        %816 = vst [vmem:[#allocation2 + $0x60] sm:$0xff] %v784
        %817 = vst [vmem:[#allocation2 + $0x68] sm:$0xff] %v785
        %818 = vst [vmem:[#allocation2 + $0x70] sm:$0xff] %v786
        %819 = vst [vmem:[#allocation2 + $0x78] sm:$0xff] %v787
        %820 = vst [vmem:[#allocation2 + $0x80] sm:$0xff] %v788
        %821 = vst [vmem:[#allocation2 + $0x88] sm:$0xff] %v789
        %822 = vst [vmem:[#allocation2 + $0x90] sm:$0xff] %v790
        %823 = vst [vmem:[#allocation2 + $0x98] sm:$0xff] %v791
        %824 = vst [vmem:[#allocation2 + $0xa0] sm:$0xff] %v792
        %825 = vst [vmem:[#allocation2 + $0xa8] sm:$0xff] %v793
        %826 = vst [vmem:[#allocation2 + $0xb0] sm:$0xff] %v794
        %827 = vst [vmem:[#allocation2 + $0xb8] sm:$0xff] %v795
        %828 = vst [vmem:[#allocation2 + $0xc0] sm:$0xff] %v796
        %829 = vst [vmem:[#allocation2 + $0xc8] sm:$0xff] %v797
        %830 = vst [vmem:[#allocation2 + $0xd0] sm:$0xff] %v798
        %831 = vst [vmem:[#allocation2 + $0xd8] sm:$0xff] %v799
        %832 = vst [vmem:[#allocation2 + $0xe0] sm:$0xff] %v800
        %833 = vst [vmem:[#allocation2 + $0xe8] sm:$0xff] %v801
        %834 = vst [vmem:[#allocation2 + $0xf0] sm:$0xff] %v802
        %835 = vst [vmem:[#allocation2 + $0xf8] sm:$0xff] %v803
        %p836 = scmp.eq.s32.totalorder %s22, 1
        // Predicated region
        $region72: #{sage_conv.1} parent=62 // pred_check
          %p837 = pneg %p836
        $region73: #{sage_conv.1} parent=62 // pred_check_branch
          %839 = sbr.rel (%p837) target = $region75
        $region74: #{sage_conv.1} parent=62 // pred_region
          %v840 = vld [vmem:[#allocation2] sm:$0xff]
          %v841 = vld [vmem:[#allocation2 + $0x8] sm:$0xff]
          %v842 = vld [vmem:[#allocation2 + $0x10] sm:$0xff]
          %v843 = vld [vmem:[#allocation2 + $0x18] sm:$0xff]
          %v844 = vld [vmem:[#allocation2 + $0x20] sm:$0xff]
          %v845 = vld [vmem:[#allocation2 + $0x28] sm:$0xff]
          %v846 = vld [vmem:[#allocation2 + $0x30] sm:$0xff]
          %v847 = vld [vmem:[#allocation2 + $0x38] sm:$0xff]
          %v848 = vld [vmem:[#allocation2 + $0x40] sm:$0xff]
          %v849 = vld [vmem:[#allocation2 + $0x48] sm:$0xff]
          %v850 = vld [vmem:[#allocation2 + $0x50] sm:$0xff]
          %v851 = vld [vmem:[#allocation2 + $0x58] sm:$0xff]
          %v852 = vld [vmem:[#allocation2 + $0x60] sm:$0xff]
          %v853 = vld [vmem:[#allocation2 + $0x68] sm:$0xff]
          %v854 = vld [vmem:[#allocation2 + $0x70] sm:$0xff]
          %v855 = vld [vmem:[#allocation2 + $0x78] sm:$0xff]
          %v856 = vld [vmem:[#allocation2 + $0x80] sm:$0xff]
          %v857 = vld [vmem:[#allocation2 + $0x88] sm:$0xff]
          %v858 = vld [vmem:[#allocation2 + $0x90] sm:$0xff]
          %v859 = vld [vmem:[#allocation2 + $0x98] sm:$0xff]
          %v860 = vld [vmem:[#allocation2 + $0xa0] sm:$0xff]
          %v861 = vld [vmem:[#allocation2 + $0xa8] sm:$0xff]
          %v862 = vld [vmem:[#allocation2 + $0xb0] sm:$0xff]
          %v863 = vld [vmem:[#allocation2 + $0xb8] sm:$0xff]
          %v864 = vld [vmem:[#allocation2 + $0xc0] sm:$0xff]
          %v865 = vld [vmem:[#allocation2 + $0xc8] sm:$0xff]
          %v866 = vld [vmem:[#allocation2 + $0xd0] sm:$0xff]
          %v867 = vld [vmem:[#allocation2 + $0xd8] sm:$0xff]
          %v868 = vld [vmem:[#allocation2 + $0xe0] sm:$0xff]
          %v869 = vld [vmem:[#allocation2 + $0xe8] sm:$0xff]
          %v870 = vld [vmem:[#allocation2 + $0xf0] sm:$0xff]
          %v871 = vld [vmem:[#allocation2 + $0xf8] sm:$0xff]
          %v872 = vmax.f32 %v840, 1.0
          %v873 = vmax.f32 %v841, 1.0
          %v874 = vmax.f32 %v842, 1.0
          %v875 = vmax.f32 %v843, 1.0
          %v876 = vmax.f32 %v844, 1.0
          %v877 = vmax.f32 %v845, 1.0
          %v878 = vmax.f32 %v846, 1.0
          %v879 = vmax.f32 %v847, 1.0
          %v880 = vmax.f32 %v848, 1.0
          %v881 = vmax.f32 %v849, 1.0
          %v882 = vmax.f32 %v850, 1.0
          %v883 = vmax.f32 %v851, 1.0
          %v884 = vmax.f32 %v852, 1.0
          %v885 = vmax.f32 %v853, 1.0
          %v886 = vmax.f32 %v854, 1.0
          %v887 = vmax.f32 %v855, 1.0
          %v888 = vmax.f32 %v856, 1.0
          %v889 = vmax.f32 %v857, 1.0
          %v890 = vmax.f32 %v858, 1.0
          %v891 = vmax.f32 %v859, 1.0
          %v892 = vmax.f32 %v860, 1.0
          %v893 = vmax.f32 %v861, 1.0
          %v894 = vmax.f32 %v862, 1.0
          %v895 = vmax.f32 %v863, 1.0
          %v896 = vmax.f32 %v864, 1.0
          %v897 = vmax.f32 %v865, 1.0
          %v898 = vmax.f32 %v866, 1.0
          %v899 = vmax.f32 %v867, 1.0
          %v900 = vmax.f32 %v868, 1.0
          %v901 = vmax.f32 %v869, 1.0
          %v902 = vmax.f32 %v870, 1.0
          %v903 = vmax.f32 %v871, 1.0
          %v904 = vrcp.pop %v872
          %v905 = vrcp.pop %v873
          %v906 = vrcp.pop %v874
          %v907 = vrcp.pop %v875
          %v908 = vrcp.pop %v876
          %v909 = vrcp.pop %v877
          %v910 = vrcp.pop %v878
          %v911 = vrcp.pop %v879
          %v912 = vrcp.pop %v880
          %v913 = vrcp.pop %v881
          %v914 = vrcp.pop %v882
          %v915 = vrcp.pop %v883
          %v916 = vrcp.pop %v884
          %v917 = vrcp.pop %v885
          %v918 = vrcp.pop %v886
          %v919 = vrcp.pop %v887
          %v920 = vrcp.pop %v888
          %v921 = vrcp.pop %v889
          %v922 = vrcp.pop %v890
          %v923 = vrcp.pop %v891
          %v924 = vrcp.pop %v892
          %v925 = vrcp.pop %v893
          %v926 = vrcp.pop %v894
          %v927 = vrcp.pop %v895
          %v928 = vrcp.pop %v896
          %v929 = vrcp.pop %v897
          %v930 = vrcp.pop %v898
          %v931 = vrcp.pop %v899
          %v932 = vrcp.pop %v900
          %v933 = vrcp.pop %v901
          %v934 = vrcp.pop %v902
          %v935 = vrcp.pop %v903
          %937 = vset.pattern.permute.xlu0 8
          %938 = vperm.xlu0 %937, %v904
          %v939 = vpop.permute.xlu0 %938
          %942 = vset.pattern.permute.xlu0 8
          %943 = vperm.xlu0 %942, %v905
          %v944 = vpop.permute.xlu0 %943
          %947 = vset.pattern.permute.xlu0 8
          %948 = vperm.xlu0 %947, %v906
          %v949 = vpop.permute.xlu0 %948
          %952 = vset.pattern.permute.xlu0 8
          %953 = vperm.xlu0 %952, %v907
          %v954 = vpop.permute.xlu0 %953
          %957 = vset.pattern.permute.xlu0 8
          %958 = vperm.xlu0 %957, %v908
          %v959 = vpop.permute.xlu0 %958
          %962 = vset.pattern.permute.xlu0 8
          %963 = vperm.xlu0 %962, %v909
          %v964 = vpop.permute.xlu0 %963
          %967 = vset.pattern.permute.xlu0 8
          %968 = vperm.xlu0 %967, %v910
          %v969 = vpop.permute.xlu0 %968
          %972 = vset.pattern.permute.xlu0 8
          %973 = vperm.xlu0 %972, %v911
          %v974 = vpop.permute.xlu0 %973
          %977 = vset.pattern.permute.xlu0 8
          %978 = vperm.xlu0 %977, %v912
          %v979 = vpop.permute.xlu0 %978
          %982 = vset.pattern.permute.xlu0 8
          %983 = vperm.xlu0 %982, %v913
          %v984 = vpop.permute.xlu0 %983
          %987 = vset.pattern.permute.xlu0 8
          %988 = vperm.xlu0 %987, %v914
          %v989 = vpop.permute.xlu0 %988
          %992 = vset.pattern.permute.xlu0 8
          %993 = vperm.xlu0 %992, %v915
          %v994 = vpop.permute.xlu0 %993
          %997 = vset.pattern.permute.xlu0 8
          %998 = vperm.xlu0 %997, %v916
          %v999 = vpop.permute.xlu0 %998
          %1002 = vset.pattern.permute.xlu0 8
          %1003 = vperm.xlu0 %1002, %v917
          %v1004 = vpop.permute.xlu0 %1003
          %1007 = vset.pattern.permute.xlu0 8
          %1008 = vperm.xlu0 %1007, %v918
          %v1009 = vpop.permute.xlu0 %1008
          %1012 = vset.pattern.permute.xlu0 8
          %1013 = vperm.xlu0 %1012, %v919
          %v1014 = vpop.permute.xlu0 %1013
          %1017 = vset.pattern.permute.xlu0 8
          %1018 = vperm.xlu0 %1017, %v920
          %v1019 = vpop.permute.xlu0 %1018
          %1022 = vset.pattern.permute.xlu0 8
          %1023 = vperm.xlu0 %1022, %v921
          %v1024 = vpop.permute.xlu0 %1023
          %1027 = vset.pattern.permute.xlu0 8
          %1028 = vperm.xlu0 %1027, %v922
          %v1029 = vpop.permute.xlu0 %1028
          %1032 = vset.pattern.permute.xlu0 8
          %1033 = vperm.xlu0 %1032, %v923
          %v1034 = vpop.permute.xlu0 %1033
          %1037 = vset.pattern.permute.xlu0 8
          %1038 = vperm.xlu0 %1037, %v924
          %v1039 = vpop.permute.xlu0 %1038
          %1042 = vset.pattern.permute.xlu0 8
          %1043 = vperm.xlu0 %1042, %v925
          %v1044 = vpop.permute.xlu0 %1043
          %1047 = vset.pattern.permute.xlu0 8
          %1048 = vperm.xlu0 %1047, %v926
          %v1049 = vpop.permute.xlu0 %1048
          %1052 = vset.pattern.permute.xlu0 8
          %1053 = vperm.xlu0 %1052, %v927
          %v1054 = vpop.permute.xlu0 %1053
          %1057 = vset.pattern.permute.xlu0 8
          %1058 = vperm.xlu0 %1057, %v928
          %v1059 = vpop.permute.xlu0 %1058
          %1062 = vset.pattern.permute.xlu0 8
          %1063 = vperm.xlu0 %1062, %v929
          %v1064 = vpop.permute.xlu0 %1063
          %1067 = vset.pattern.permute.xlu0 8
          %1068 = vperm.xlu0 %1067, %v930
          %v1069 = vpop.permute.xlu0 %1068
          %1072 = vset.pattern.permute.xlu0 8
          %1073 = vperm.xlu0 %1072, %v931
          %v1074 = vpop.permute.xlu0 %1073
          %1077 = vset.pattern.permute.xlu0 8
          %1078 = vperm.xlu0 %1077, %v932
          %v1079 = vpop.permute.xlu0 %1078
          %1082 = vset.pattern.permute.xlu0 8
          %1083 = vperm.xlu0 %1082, %v933
          %v1084 = vpop.permute.xlu0 %1083
          %1087 = vset.pattern.permute.xlu0 8
          %1088 = vperm.xlu0 %1087, %v934
          %v1089 = vpop.permute.xlu0 %1088
          %1092 = vset.pattern.permute.xlu0 8
          %1093 = vperm.xlu0 %1092, %v935
          %v1094 = vpop.permute.xlu0 %1093
          %v1096 = vmul.f32 %v840, %v939
          %v1097 = vmul.f32 %v841, %v944
          %v1098 = vmul.f32 %v842, %v949
          %v1099 = vmul.f32 %v843, %v954
          %v1100 = vmul.f32 %v844, %v959
          %v1101 = vmul.f32 %v845, %v964
          %v1102 = vmul.f32 %v846, %v969
          %v1103 = vmul.f32 %v847, %v974
          %v1104 = vmul.f32 %v848, %v979
          %v1105 = vmul.f32 %v849, %v984
          %v1106 = vmul.f32 %v850, %v989
          %v1107 = vmul.f32 %v851, %v994
          %v1108 = vmul.f32 %v852, %v999
          %v1109 = vmul.f32 %v853, %v1004
          %v1110 = vmul.f32 %v854, %v1009
          %v1111 = vmul.f32 %v855, %v1014
          %v1112 = vmul.f32 %v856, %v1019
          %v1113 = vmul.f32 %v857, %v1024
          %v1114 = vmul.f32 %v858, %v1029
          %v1115 = vmul.f32 %v859, %v1034
          %v1116 = vmul.f32 %v860, %v1039
          %v1117 = vmul.f32 %v861, %v1044
          %v1118 = vmul.f32 %v862, %v1049
          %v1119 = vmul.f32 %v863, %v1054
          %v1120 = vmul.f32 %v864, %v1059
          %v1121 = vmul.f32 %v865, %v1064
          %v1122 = vmul.f32 %v866, %v1069
          %v1123 = vmul.f32 %v867, %v1074
          %v1124 = vmul.f32 %v868, %v1079
          %v1125 = vmul.f32 %v869, %v1084
          %v1126 = vmul.f32 %v870, %v1089
          %v1127 = vmul.f32 %v871, %v1094
          %v1128 = vpack.c.bf16 %v1097, %v1096
          %v1129 = vpack.c.bf16 %v1099, %v1098
          %v1130 = vpack.c.bf16 %v1101, %v1100
          %v1131 = vpack.c.bf16 %v1103, %v1102
          %v1132 = vpack.c.bf16 %v1105, %v1104
          %v1133 = vpack.c.bf16 %v1107, %v1106
          %v1134 = vpack.c.bf16 %v1109, %v1108
          %v1135 = vpack.c.bf16 %v1111, %v1110
          %v1136 = vpack.c.bf16 %v1113, %v1112
          %v1137 = vpack.c.bf16 %v1115, %v1114
          %v1138 = vpack.c.bf16 %v1117, %v1116
          %v1139 = vpack.c.bf16 %v1119, %v1118
          %v1140 = vpack.c.bf16 %v1121, %v1120
          %v1141 = vpack.c.bf16 %v1123, %v1122
          %v1142 = vpack.c.bf16 %v1125, %v1124
          %v1143 = vpack.c.bf16 %v1127, %v1126
          %v1144 = vld [vmem:[%s3] sm:$0xf]
          %v1145 = vld [vmem:[%s3 + $0x4] sm:$0xf]
          %v1146 = vld [vmem:[%s3 + $0x8] sm:$0xf]
          %v1147 = vld [vmem:[%s3 + $0xc] sm:$0xf]
          %v1148 = vld [vmem:[%s3 + $0x10] sm:$0xf]
          %v1149 = vld [vmem:[%s3 + $0x14] sm:$0xf]
          %v1150 = vld [vmem:[%s3 + $0x18] sm:$0xf]
          %v1151 = vld [vmem:[%s3 + $0x1c] sm:$0xf]
          %v1152 = vld [vmem:[%s3 + $0x20] sm:$0xf]
          %v1153 = vld [vmem:[%s3 + $0x24] sm:$0xf]
          %v1154 = vld [vmem:[%s3 + $0x28] sm:$0xf]
          %v1155 = vld [vmem:[%s3 + $0x2c] sm:$0xf]
          %v1156 = vld [vmem:[%s3 + $0x30] sm:$0xf]
          %v1157 = vld [vmem:[%s3 + $0x34] sm:$0xf]
          %v1158 = vld [vmem:[%s3 + $0x38] sm:$0xf]
          %v1159 = vld [vmem:[%s3 + $0x3c] sm:$0xf]
          %v1160 = vld [vmem:[%s358] sm:$0xf]
          %v1161 = vld [vmem:[%s358 + $0x4] sm:$0xf]
          %v1162 = vld [vmem:[%s358 + $0x8] sm:$0xf]
          %v1163 = vld [vmem:[%s358 + $0xc] sm:$0xf]
          %v1164 = vld [vmem:[%s358 + $0x10] sm:$0xf]
          %v1165 = vld [vmem:[%s358 + $0x14] sm:$0xf]
          %v1166 = vld [vmem:[%s358 + $0x18] sm:$0xf]
          %v1167 = vld [vmem:[%s358 + $0x1c] sm:$0xf]
          %v1168 = vld [vmem:[%s358 + $0x20] sm:$0xf]
          %v1169 = vld [vmem:[%s358 + $0x24] sm:$0xf]
          %v1170 = vld [vmem:[%s358 + $0x28] sm:$0xf]
          %v1171 = vld [vmem:[%s358 + $0x2c] sm:$0xf]
          %v1172 = vld [vmem:[%s358 + $0x30] sm:$0xf]
          %v1173 = vld [vmem:[%s358 + $0x34] sm:$0xf]
          %v1174 = vld [vmem:[%s358 + $0x38] sm:$0xf]
          %v1175 = vld [vmem:[%s358 + $0x3c] sm:$0xf]
          %v1176 = vld [vmem:[%s358 + $0x40] sm:$0xf]
          %v1177 = vld [vmem:[%s358 + $0x44] sm:$0xf]
          %v1178 = vld [vmem:[%s358 + $0x48] sm:$0xf]
          %v1179 = vld [vmem:[%s358 + $0x4c] sm:$0xf]
          %v1180 = vld [vmem:[%s358 + $0x50] sm:$0xf]
          %v1181 = vld [vmem:[%s358 + $0x54] sm:$0xf]
          %v1182 = vld [vmem:[%s358 + $0x58] sm:$0xf]
          %v1183 = vld [vmem:[%s358 + $0x5c] sm:$0xf]
          %v1184 = vld [vmem:[%s358 + $0x60] sm:$0xf]
          %v1185 = vld [vmem:[%s358 + $0x64] sm:$0xf]
          %v1186 = vld [vmem:[%s358 + $0x68] sm:$0xf]
          %v1187 = vld [vmem:[%s358 + $0x6c] sm:$0xf]
          %v1188 = vld [vmem:[%s358 + $0x70] sm:$0xf]
          %v1189 = vld [vmem:[%s358 + $0x74] sm:$0xf]
          %v1190 = vld [vmem:[%s358 + $0x78] sm:$0xf]
          %v1191 = vld [vmem:[%s358 + $0x7c] sm:$0xf]
          %v1192 = vld [vmem:[%s4] sm:$0xf]
          %v1193 = vld [vmem:[%s4 + $0x4] sm:$0xf]
          %v1194 = vld [vmem:[%s4 + $0x8] sm:$0xf]
          %v1195 = vld [vmem:[%s4 + $0xc] sm:$0xf]
          %v1196 = vld [vmem:[%s4 + $0x10] sm:$0xf]
          %v1197 = vld [vmem:[%s4 + $0x14] sm:$0xf]
          %v1198 = vld [vmem:[%s4 + $0x18] sm:$0xf]
          %v1199 = vld [vmem:[%s4 + $0x1c] sm:$0xf]
          %v1200 = vld [vmem:[%s4 + $0x20] sm:$0xf]
          %v1201 = vld [vmem:[%s4 + $0x24] sm:$0xf]
          %v1202 = vld [vmem:[%s4 + $0x28] sm:$0xf]
          %v1203 = vld [vmem:[%s4 + $0x2c] sm:$0xf]
          %v1204 = vld [vmem:[%s4 + $0x30] sm:$0xf]
          %v1205 = vld [vmem:[%s4 + $0x34] sm:$0xf]
          %v1206 = vld [vmem:[%s4 + $0x38] sm:$0xf]
          %v1207 = vld [vmem:[%s4 + $0x3c] sm:$0xf]
          %v1240 = vunpack.c.l.b16 %v1160
          %v1241 = vunpack.c.l.b16 %v1161
          %v1242 = vunpack.c.l.b16 %v1162
          %v1243 = vunpack.c.l.b16 %v1163
          %v1244 = vunpack.c.l.b16 %v1164
          %v1245 = vunpack.c.l.b16 %v1165
          %v1246 = vunpack.c.l.b16 %v1166
          %v1247 = vunpack.c.l.b16 %v1167
          %v1248 = vunpack.c.l.b16 %v1168
          %v1249 = vunpack.c.l.b16 %v1169
          %v1250 = vunpack.c.l.b16 %v1170
          %v1251 = vunpack.c.l.b16 %v1171
          %v1252 = vunpack.c.l.b16 %v1172
          %v1253 = vunpack.c.l.b16 %v1173
          %v1254 = vunpack.c.l.b16 %v1174
          %v1255 = vunpack.c.l.b16 %v1175
          %v1256 = vunpack.c.l.b16 %v1176
          %v1257 = vunpack.c.l.b16 %v1177
          %v1258 = vunpack.c.l.b16 %v1178
          %v1259 = vunpack.c.l.b16 %v1179
          %v1260 = vunpack.c.l.b16 %v1180
          %v1261 = vunpack.c.l.b16 %v1181
          %v1262 = vunpack.c.l.b16 %v1182
          %v1263 = vunpack.c.l.b16 %v1183
          %v1264 = vunpack.c.l.b16 %v1184
          %v1265 = vunpack.c.l.b16 %v1185
          %v1266 = vunpack.c.l.b16 %v1186
          %v1267 = vunpack.c.l.b16 %v1187
          %v1268 = vunpack.c.l.b16 %v1188
          %v1269 = vunpack.c.l.b16 %v1189
          %v1270 = vunpack.c.l.b16 %v1190
          %v1271 = vunpack.c.l.b16 %v1191
          %v1272 = vpack.c.b16 %v1241, %v1240
          %v1273 = vpack.c.b16 %v1243, %v1242
          %v1274 = vpack.c.b16 %v1245, %v1244
          %v1275 = vpack.c.b16 %v1247, %v1246
          %v1276 = vpack.c.b16 %v1249, %v1248
          %v1277 = vpack.c.b16 %v1251, %v1250
          %v1278 = vpack.c.b16 %v1253, %v1252
          %v1279 = vpack.c.b16 %v1255, %v1254
          %v1280 = vpack.c.b16 %v1257, %v1256
          %v1281 = vpack.c.b16 %v1259, %v1258
          %v1282 = vpack.c.b16 %v1261, %v1260
          %v1283 = vpack.c.b16 %v1263, %v1262
          %v1284 = vpack.c.b16 %v1265, %v1264
          %v1285 = vpack.c.b16 %v1267, %v1266
          %v1286 = vpack.c.b16 %v1269, %v1268
          %v1287 = vpack.c.b16 %v1271, %v1270
          %v1320 = vunpack.c.l.b16 %v1192
          %v1321 = vunpack.c.l.b16 %v1193
          %v1322 = vunpack.c.l.b16 %v1194
          %v1323 = vunpack.c.l.b16 %v1195
          %v1324 = vunpack.c.l.b16 %v1196
          %v1325 = vunpack.c.l.b16 %v1197
          %v1326 = vunpack.c.l.b16 %v1198
          %v1327 = vunpack.c.l.b16 %v1199
          %v1328 = vunpack.c.l.b16 %v1200
          %v1329 = vunpack.c.l.b16 %v1201
          %v1330 = vunpack.c.l.b16 %v1202
          %v1331 = vunpack.c.l.b16 %v1203
          %v1332 = vunpack.c.l.b16 %v1204
          %v1333 = vunpack.c.l.b16 %v1205
          %v1334 = vunpack.c.l.b16 %v1206
          %v1335 = vunpack.c.l.b16 %v1207
          %v1336 = vpack.c.b16 %v1321, %v1320
          %v1337 = vpack.c.b16 %v1323, %v1322
          %v1338 = vpack.c.b16 %v1325, %v1324
          %v1339 = vpack.c.b16 %v1327, %v1326
          %v1340 = vpack.c.b16 %v1329, %v1328
          %v1341 = vpack.c.b16 %v1331, %v1330
          %v1342 = vpack.c.b16 %v1333, %v1332
          %v1343 = vpack.c.b16 %v1335, %v1334
          %1352 = vmatprep.subr.bf16.mxu0 0
          %1353 = vmatpush1.bf16.msra.mxu0 %v1336
          %1354 = vmatprep.subr.bf16.mxu0 0
          %1355 = vmatpush1.bf16.msra.mxu0 %v1337
          %1356 = vmatprep.subr.bf16.mxu0 0
          %1357 = vmatpush1.bf16.msra.mxu0 %v1338
          %1358 = vmatprep.subr.bf16.mxu0 0
          %1359 = vmatpush1.bf16.msra.mxu0 %v1339
          %1360 = vmatprep.subr.bf16.mxu0 0
          %1361 = vmatpush1.bf16.msra.mxu0 %v1340
          %1362 = vmatprep.subr.bf16.mxu0 0
          %1363 = vmatpush1.bf16.msra.mxu0 %v1341
          %1364 = vmatprep.subr.bf16.mxu0 0
          %1365 = vmatpush1.bf16.msra.mxu0 %v1342
          %1366 = vmatprep.subr.bf16.mxu0 0
          %1367 = vmatpush1.bf16.msra.mxu0 %v1343
          %1368 = vmatprep.subr.bf16.mxu0 0
          %1369 = vmatpush1.bf16.msra.mxu0 0
          %1370 = vmatprep.subr.bf16.mxu0 0
          %1371 = vmatpush1.bf16.msra.mxu0 0
          %1372 = vmatprep.subr.bf16.mxu0 0
          %1373 = vmatpush1.bf16.msra.mxu0 0
          %1374 = vmatprep.subr.bf16.mxu0 0
          %1375 = vmatpush1.bf16.msra.mxu0 0
          %1376 = vmatprep.subr.bf16.mxu0 0
          %1377 = vmatpush1.bf16.msra.mxu0 0
          %1378 = vmatprep.subr.bf16.mxu0 0
          %1379 = vmatpush1.bf16.msra.mxu0 0
          %1380 = vmatprep.subr.bf16.mxu0 0
          %1381 = vmatpush1.bf16.msra.mxu0 0
          %1382 = vmatprep.subr.bf16.mxu0 0
          %1383 = vmatpush1.bf16.msra.mxu0 0
          %1384 = vmatprep.mubr.bf16.mxu0 0
          %1385 = vmatmul.mubr.bf16.gmra.mrb[0].mxu0 %v1272
          %v1386 = vpop.f32.mrb[0].mxu0
          %v1387 = vadd.f32 0.0, %v1386
          %v1388 = vpop.f32.mrb[0].mxu0
          %v1389 = vpop.f32.mrb[0].mxu0
          %v1390 = vadd.f32 0.0, %v1389
          %v1391 = vpop.f32.mrb[0].mxu0
          %1392 = vmatprep.mubr.bf16.mxu0 0
          %1393 = vmatmul.mubr.bf16.gmra.mrb[0].mxu0 %v1273
          %v1394 = vpop.f32.mrb[0].mxu0
          %v1395 = vadd.f32 0.0, %v1394
          %v1396 = vpop.f32.mrb[0].mxu0
          %v1397 = vpop.f32.mrb[0].mxu0
          %v1398 = vadd.f32 0.0, %v1397
          %v1399 = vpop.f32.mrb[0].mxu0
          %1400 = vmatprep.mubr.bf16.mxu0 0
          %1401 = vmatmul.mubr.bf16.gmra.mrb[0].mxu0 %v1274
          %v1402 = vpop.f32.mrb[0].mxu0
          %v1403 = vadd.f32 0.0, %v1402
          %v1404 = vpop.f32.mrb[0].mxu0
          %v1405 = vpop.f32.mrb[0].mxu0
          %v1406 = vadd.f32 0.0, %v1405
          %v1407 = vpop.f32.mrb[0].mxu0
          %1408 = vmatprep.mubr.bf16.mxu0 0
          %1409 = vmatmul.mubr.bf16.gmra.mrb[0].mxu0 %v1275
          %v1410 = vpop.f32.mrb[0].mxu0
          %v1411 = vadd.f32 0.0, %v1410
          %v1412 = vpop.f32.mrb[0].mxu0
          %v1413 = vpop.f32.mrb[0].mxu0
          %v1414 = vadd.f32 0.0, %v1413
          %v1415 = vpop.f32.mrb[0].mxu0
          %1416 = vmatprep.mubr.bf16.mxu0 0
          %1417 = vmatmul.mubr.bf16.gmra.mrb[0].mxu0 %v1276
          %v1418 = vpop.f32.mrb[0].mxu0
          %v1419 = vadd.f32 0.0, %v1418
          %v1420 = vpop.f32.mrb[0].mxu0
          %v1421 = vpop.f32.mrb[0].mxu0
          %v1422 = vadd.f32 0.0, %v1421
          %v1423 = vpop.f32.mrb[0].mxu0
          %1424 = vmatprep.mubr.bf16.mxu0 0
          %1425 = vmatmul.mubr.bf16.gmra.mrb[0].mxu0 %v1277
          %v1426 = vpop.f32.mrb[0].mxu0
          %v1427 = vadd.f32 0.0, %v1426
          %v1428 = vpop.f32.mrb[0].mxu0
          %v1429 = vpop.f32.mrb[0].mxu0
          %v1430 = vadd.f32 0.0, %v1429
          %v1431 = vpop.f32.mrb[0].mxu0
          %1432 = vmatprep.mubr.bf16.mxu0 0
          %1433 = vmatmul.mubr.bf16.gmra.mrb[0].mxu0 %v1278
          %v1434 = vpop.f32.mrb[0].mxu0
          %v1435 = vadd.f32 0.0, %v1434
          %v1436 = vpop.f32.mrb[0].mxu0
          %v1437 = vpop.f32.mrb[0].mxu0
          %v1438 = vadd.f32 0.0, %v1437
          %v1439 = vpop.f32.mrb[0].mxu0
          %1440 = vmatprep.mubr.bf16.mxu0 0
          %1441 = vmatmul.mubr.bf16.gmra.mrb[0].mxu0 %v1279
          %v1442 = vpop.f32.mrb[0].mxu0
          %v1443 = vadd.f32 0.0, %v1442
          %v1444 = vpop.f32.mrb[0].mxu0
          %v1445 = vpop.f32.mrb[0].mxu0
          %v1446 = vadd.f32 0.0, %v1445
          %v1447 = vpop.f32.mrb[0].mxu0
          %1448 = vmatprep.mubr.bf16.mxu0 0
          %1449 = vmatmul.mubr.bf16.gmra.mrb[0].mxu0 %v1280
          %v1450 = vpop.f32.mrb[0].mxu0
          %v1451 = vadd.f32 0.0, %v1450
          %v1452 = vpop.f32.mrb[0].mxu0
          %v1453 = vpop.f32.mrb[0].mxu0
          %v1454 = vadd.f32 0.0, %v1453
          %v1455 = vpop.f32.mrb[0].mxu0
          %1456 = vmatprep.mubr.bf16.mxu0 0
          %1457 = vmatmul.mubr.bf16.gmra.mrb[0].mxu0 %v1281
          %v1458 = vpop.f32.mrb[0].mxu0
          %v1459 = vadd.f32 0.0, %v1458
          %v1460 = vpop.f32.mrb[0].mxu0
          %v1461 = vpop.f32.mrb[0].mxu0
          %v1462 = vadd.f32 0.0, %v1461
          %v1463 = vpop.f32.mrb[0].mxu0
          %1464 = vmatprep.mubr.bf16.mxu0 0
          %1465 = vmatmul.mubr.bf16.gmra.mrb[0].mxu0 %v1282
          %v1466 = vpop.f32.mrb[0].mxu0
          %v1467 = vadd.f32 0.0, %v1466
          %v1468 = vpop.f32.mrb[0].mxu0
          %v1469 = vpop.f32.mrb[0].mxu0
          %v1470 = vadd.f32 0.0, %v1469
          %v1471 = vpop.f32.mrb[0].mxu0
          %1472 = vmatprep.mubr.bf16.mxu0 0
          %1473 = vmatmul.mubr.bf16.gmra.mrb[0].mxu0 %v1283
          %v1474 = vpop.f32.mrb[0].mxu0
          %v1475 = vadd.f32 0.0, %v1474
          %v1476 = vpop.f32.mrb[0].mxu0
          %v1477 = vpop.f32.mrb[0].mxu0
          %v1478 = vadd.f32 0.0, %v1477
          %v1479 = vpop.f32.mrb[0].mxu0
          %1480 = vmatprep.mubr.bf16.mxu0 0
          %1481 = vmatmul.mubr.bf16.gmra.mrb[0].mxu0 %v1284
          %v1482 = vpop.f32.mrb[0].mxu0
          %v1483 = vadd.f32 0.0, %v1482
          %v1484 = vpop.f32.mrb[0].mxu0
          %v1485 = vpop.f32.mrb[0].mxu0
          %v1486 = vadd.f32 0.0, %v1485
          %v1487 = vpop.f32.mrb[0].mxu0
          %1488 = vmatprep.mubr.bf16.mxu0 0
          %1489 = vmatmul.mubr.bf16.gmra.mrb[0].mxu0 %v1285
          %v1490 = vpop.f32.mrb[0].mxu0
          %v1491 = vadd.f32 0.0, %v1490
          %v1492 = vpop.f32.mrb[0].mxu0
          %v1493 = vpop.f32.mrb[0].mxu0
          %v1494 = vadd.f32 0.0, %v1493
          %v1495 = vpop.f32.mrb[0].mxu0
          %1496 = vmatprep.mubr.bf16.mxu0 0
          %1497 = vmatmul.mubr.bf16.gmra.mrb[0].mxu0 %v1286
          %v1498 = vpop.f32.mrb[0].mxu0
          %v1499 = vadd.f32 0.0, %v1498
          %v1500 = vpop.f32.mrb[0].mxu0
          %v1501 = vpop.f32.mrb[0].mxu0
          %v1502 = vadd.f32 0.0, %v1501
          %v1503 = vpop.f32.mrb[0].mxu0
          %1504 = vmatprep.mubr.bf16.mxu0 0
          %1505 = vmatmul.mubr.bf16.gmra.mrb[0].mxu0 %v1287
          %v1506 = vpop.f32.mrb[0].mxu0
          %v1507 = vadd.f32 0.0, %v1506
          %v1508 = vpop.f32.mrb[0].mxu0
          %v1509 = vpop.f32.mrb[0].mxu0
          %v1510 = vadd.f32 0.0, %v1509
          %v1511 = vpop.f32.mrb[0].mxu0
          %1512 = vdwg.mxu0
          %v1529 = vunpack.c.l.b16 %v1144
          %v1530 = vunpack.c.l.b16 %v1145
          %v1531 = vunpack.c.l.b16 %v1146
          %v1532 = vunpack.c.l.b16 %v1147
          %v1533 = vunpack.c.l.b16 %v1148
          %v1534 = vunpack.c.l.b16 %v1149
          %v1535 = vunpack.c.l.b16 %v1150
          %v1536 = vunpack.c.l.b16 %v1151
          %v1537 = vunpack.c.l.b16 %v1152
          %v1538 = vunpack.c.l.b16 %v1153
          %v1539 = vunpack.c.l.b16 %v1154
          %v1540 = vunpack.c.l.b16 %v1155
          %v1541 = vunpack.c.l.b16 %v1156
          %v1542 = vunpack.c.l.b16 %v1157
          %v1543 = vunpack.c.l.b16 %v1158
          %v1544 = vunpack.c.l.b16 %v1159
          %v1545 = vpack.c.b16 %v1530, %v1529
          %v1546 = vpack.c.b16 %v1532, %v1531
          %v1547 = vpack.c.b16 %v1534, %v1533
          %v1548 = vpack.c.b16 %v1536, %v1535
          %v1549 = vpack.c.b16 %v1538, %v1537
          %v1550 = vpack.c.b16 %v1540, %v1539
          %v1551 = vpack.c.b16 %v1542, %v1541
          %v1552 = vpack.c.b16 %v1544, %v1543
          %1561 = vmatprep.subr.bf16.mxu0 0
          %1562 = vmatpush1.bf16.msra.mxu0 %v1545
          %1563 = vmatprep.subr.bf16.mxu0 0
          %1564 = vmatpush1.bf16.msra.mxu0 %v1546
          %1565 = vmatprep.subr.bf16.mxu0 0
          %1566 = vmatpush1.bf16.msra.mxu0 %v1547
          %1567 = vmatprep.subr.bf16.mxu0 0
          %1568 = vmatpush1.bf16.msra.mxu0 %v1548
          %1569 = vmatprep.subr.bf16.mxu0 0
          %1570 = vmatpush1.bf16.msra.mxu0 %v1549
          %1571 = vmatprep.subr.bf16.mxu0 0
          %1572 = vmatpush1.bf16.msra.mxu0 %v1550
          %1573 = vmatprep.subr.bf16.mxu0 0
          %1574 = vmatpush1.bf16.msra.mxu0 %v1551
          %1575 = vmatprep.subr.bf16.mxu0 0
          %1576 = vmatpush1.bf16.msra.mxu0 %v1552
          %1577 = vmatprep.subr.bf16.mxu0 0
          %1578 = vmatpush1.bf16.msra.mxu0 0
          %1579 = vmatprep.subr.bf16.mxu0 0
          %1580 = vmatpush1.bf16.msra.mxu0 0
          %1581 = vmatprep.subr.bf16.mxu0 0
          %1582 = vmatpush1.bf16.msra.mxu0 0
          %1583 = vmatprep.subr.bf16.mxu0 0
          %1584 = vmatpush1.bf16.msra.mxu0 0
          %1585 = vmatprep.subr.bf16.mxu0 0
          %1586 = vmatpush1.bf16.msra.mxu0 0
          %1587 = vmatprep.subr.bf16.mxu0 0
          %1588 = vmatpush1.bf16.msra.mxu0 0
          %1589 = vmatprep.subr.bf16.mxu0 0
          %1590 = vmatpush1.bf16.msra.mxu0 0
          %1591 = vmatprep.subr.bf16.mxu0 0
          %1592 = vmatpush1.bf16.msra.mxu0 0
          %1593 = vmatprep.mubr.bf16.mxu0 0
          %1594 = vmatmul.mubr.bf16.gmra.mrb[0].mxu0 %v1128
          %v1595 = vpop.f32.mrb[0].mxu0
          %v1596 = vadd.f32 %v1387, %v1595
          %v1597 = vpop.f32.mrb[0].mxu0
          %v1598 = vpop.f32.mrb[0].mxu0
          %v1599 = vadd.f32 %v1390, %v1598
          %v1600 = vpop.f32.mrb[0].mxu0
          %1601 = vmatprep.mubr.bf16.mxu0 0
          %1602 = vmatmul.mubr.bf16.gmra.mrb[0].mxu0 %v1129
          %v1603 = vpop.f32.mrb[0].mxu0
          %v1604 = vadd.f32 %v1395, %v1603
          %v1605 = vpop.f32.mrb[0].mxu0
          %v1606 = vpop.f32.mrb[0].mxu0
          %v1607 = vadd.f32 %v1398, %v1606
          %v1608 = vpop.f32.mrb[0].mxu0
          %1609 = vmatprep.mubr.bf16.mxu0 0
          %1610 = vmatmul.mubr.bf16.gmra.mrb[0].mxu0 %v1130
          %v1611 = vpop.f32.mrb[0].mxu0
          %v1612 = vadd.f32 %v1403, %v1611
          %v1613 = vpop.f32.mrb[0].mxu0
          %v1614 = vpop.f32.mrb[0].mxu0
          %v1615 = vadd.f32 %v1406, %v1614
          %v1616 = vpop.f32.mrb[0].mxu0
          %1617 = vmatprep.mubr.bf16.mxu0 0
          %1618 = vmatmul.mubr.bf16.gmra.mrb[0].mxu0 %v1131
          %v1619 = vpop.f32.mrb[0].mxu0
          %v1620 = vadd.f32 %v1411, %v1619
          %v1621 = vpop.f32.mrb[0].mxu0
          %v1622 = vpop.f32.mrb[0].mxu0
          %v1623 = vadd.f32 %v1414, %v1622
          %v1624 = vpop.f32.mrb[0].mxu0
          %1625 = vmatprep.mubr.bf16.mxu0 0
          %1626 = vmatmul.mubr.bf16.gmra.mrb[0].mxu0 %v1132
          %v1627 = vpop.f32.mrb[0].mxu0
          %v1628 = vadd.f32 %v1419, %v1627
          %v1629 = vpop.f32.mrb[0].mxu0
          %v1630 = vpop.f32.mrb[0].mxu0
          %v1631 = vadd.f32 %v1422, %v1630
          %v1632 = vpop.f32.mrb[0].mxu0
          %1633 = vmatprep.mubr.bf16.mxu0 0
          %1634 = vmatmul.mubr.bf16.gmra.mrb[0].mxu0 %v1133
          %v1635 = vpop.f32.mrb[0].mxu0
          %v1636 = vadd.f32 %v1427, %v1635
          %v1637 = vpop.f32.mrb[0].mxu0
          %v1638 = vpop.f32.mrb[0].mxu0
          %v1639 = vadd.f32 %v1430, %v1638
          %v1640 = vpop.f32.mrb[0].mxu0
          %1641 = vmatprep.mubr.bf16.mxu0 0
          %1642 = vmatmul.mubr.bf16.gmra.mrb[0].mxu0 %v1134
          %v1643 = vpop.f32.mrb[0].mxu0
          %v1644 = vadd.f32 %v1435, %v1643
          %v1645 = vpop.f32.mrb[0].mxu0
          %v1646 = vpop.f32.mrb[0].mxu0
          %v1647 = vadd.f32 %v1438, %v1646
          %v1648 = vpop.f32.mrb[0].mxu0
          %1649 = vmatprep.mubr.bf16.mxu0 0
          %1650 = vmatmul.mubr.bf16.gmra.mrb[0].mxu0 %v1135
          %v1651 = vpop.f32.mrb[0].mxu0
          %v1652 = vadd.f32 %v1443, %v1651
          %v1653 = vpop.f32.mrb[0].mxu0
          %v1654 = vpop.f32.mrb[0].mxu0
          %v1655 = vadd.f32 %v1446, %v1654
          %v1656 = vpop.f32.mrb[0].mxu0
          %1657 = vmatprep.mubr.bf16.mxu0 0
          %1658 = vmatmul.mubr.bf16.gmra.mrb[0].mxu0 %v1136
          %v1659 = vpop.f32.mrb[0].mxu0
          %v1660 = vadd.f32 %v1451, %v1659
          %v1661 = vpop.f32.mrb[0].mxu0
          %v1662 = vpop.f32.mrb[0].mxu0
          %v1663 = vadd.f32 %v1454, %v1662
          %v1664 = vpop.f32.mrb[0].mxu0
          %1665 = vmatprep.mubr.bf16.mxu0 0
          %1666 = vmatmul.mubr.bf16.gmra.mrb[0].mxu0 %v1137
          %v1667 = vpop.f32.mrb[0].mxu0
          %v1668 = vadd.f32 %v1459, %v1667
          %v1669 = vpop.f32.mrb[0].mxu0
          %v1670 = vpop.f32.mrb[0].mxu0
          %v1671 = vadd.f32 %v1462, %v1670
          %v1672 = vpop.f32.mrb[0].mxu0
          %1673 = vmatprep.mubr.bf16.mxu0 0
          %1674 = vmatmul.mubr.bf16.gmra.mrb[0].mxu0 %v1138
          %v1675 = vpop.f32.mrb[0].mxu0
          %v1676 = vadd.f32 %v1467, %v1675
          %v1677 = vpop.f32.mrb[0].mxu0
          %v1678 = vpop.f32.mrb[0].mxu0
          %v1679 = vadd.f32 %v1470, %v1678
          %v1680 = vpop.f32.mrb[0].mxu0
          %1681 = vmatprep.mubr.bf16.mxu0 0
          %1682 = vmatmul.mubr.bf16.gmra.mrb[0].mxu0 %v1139
          %v1683 = vpop.f32.mrb[0].mxu0
          %v1684 = vadd.f32 %v1475, %v1683
          %v1685 = vpop.f32.mrb[0].mxu0
          %v1686 = vpop.f32.mrb[0].mxu0
          %v1687 = vadd.f32 %v1478, %v1686
          %v1688 = vpop.f32.mrb[0].mxu0
          %1689 = vmatprep.mubr.bf16.mxu0 0
          %1690 = vmatmul.mubr.bf16.gmra.mrb[0].mxu0 %v1140
          %v1691 = vpop.f32.mrb[0].mxu0
          %v1692 = vadd.f32 %v1483, %v1691
          %v1693 = vpop.f32.mrb[0].mxu0
          %v1694 = vpop.f32.mrb[0].mxu0
          %v1695 = vadd.f32 %v1486, %v1694
          %v1696 = vpop.f32.mrb[0].mxu0
          %1697 = vmatprep.mubr.bf16.mxu0 0
          %1698 = vmatmul.mubr.bf16.gmra.mrb[0].mxu0 %v1141
          %v1699 = vpop.f32.mrb[0].mxu0
          %v1700 = vadd.f32 %v1491, %v1699
          %v1701 = vpop.f32.mrb[0].mxu0
          %v1702 = vpop.f32.mrb[0].mxu0
          %v1703 = vadd.f32 %v1494, %v1702
          %v1704 = vpop.f32.mrb[0].mxu0
          %1705 = vmatprep.mubr.bf16.mxu0 0
          %1706 = vmatmul.mubr.bf16.gmra.mrb[0].mxu0 %v1142
          %v1707 = vpop.f32.mrb[0].mxu0
          %v1708 = vadd.f32 %v1499, %v1707
          %v1709 = vpop.f32.mrb[0].mxu0
          %v1710 = vpop.f32.mrb[0].mxu0
          %v1711 = vadd.f32 %v1502, %v1710
          %v1712 = vpop.f32.mrb[0].mxu0
          %1713 = vmatprep.mubr.bf16.mxu0 0
          %1714 = vmatmul.mubr.bf16.gmra.mrb[0].mxu0 %v1143
          %v1715 = vpop.f32.mrb[0].mxu0
          %v1716 = vadd.f32 %v1507, %v1715
          %v1717 = vpop.f32.mrb[0].mxu0
          %v1718 = vpop.f32.mrb[0].mxu0
          %v1719 = vadd.f32 %v1510, %v1718
          %v1720 = vpop.f32.mrb[0].mxu0
          %1721 = vdwg.mxu0
          %v1722 = vld [vmem:[%s5] sm:$0x1]
          %v1724 = vlaneseq
          %v1725 = vshrl.u32 %v1724, 7
          %v1726 = vsub.s32 0, %v1725
          %v1727 = vrot.slane %v1722, %v1726
          %v1729 = vadd.f32 %v1596, %v1727
          %v1730 = vadd.f32 %v1599, %v1727
          %v1731 = vadd.f32 %v1604, %v1727
          %v1732 = vadd.f32 %v1607, %v1727
          %v1733 = vadd.f32 %v1612, %v1727
          %v1734 = vadd.f32 %v1615, %v1727
          %v1735 = vadd.f32 %v1620, %v1727
          %v1736 = vadd.f32 %v1623, %v1727
          %v1737 = vadd.f32 %v1628, %v1727
          %v1738 = vadd.f32 %v1631, %v1727
          %v1739 = vadd.f32 %v1636, %v1727
          %v1740 = vadd.f32 %v1639, %v1727
          %v1741 = vadd.f32 %v1644, %v1727
          %v1742 = vadd.f32 %v1647, %v1727
          %v1743 = vadd.f32 %v1652, %v1727
          %v1744 = vadd.f32 %v1655, %v1727
          %v1745 = vadd.f32 %v1660, %v1727
          %v1746 = vadd.f32 %v1663, %v1727
          %v1747 = vadd.f32 %v1668, %v1727
          %v1748 = vadd.f32 %v1671, %v1727
          %v1749 = vadd.f32 %v1676, %v1727
          %v1750 = vadd.f32 %v1679, %v1727
          %v1751 = vadd.f32 %v1684, %v1727
          %v1752 = vadd.f32 %v1687, %v1727
          %v1753 = vadd.f32 %v1692, %v1727
          %v1754 = vadd.f32 %v1695, %v1727
          %v1755 = vadd.f32 %v1700, %v1727
          %v1756 = vadd.f32 %v1703, %v1727
          %v1757 = vadd.f32 %v1708, %v1727
          %v1758 = vadd.f32 %v1711, %v1727
          %v1759 = vadd.f32 %v1716, %v1727
          %v1760 = vadd.f32 %v1719, %v1727
          %1761 = vst [vmem:[%s364] sm:$0xff] %v1729
          %1762 = vst [vmem:[%s364 + $0x8] sm:$0xff] %v1730
          %1763 = vst [vmem:[%s364 + $0x10] sm:$0xff] %v1731
          %1764 = vst [vmem:[%s364 + $0x18] sm:$0xff] %v1732
          %1765 = vst [vmem:[%s364 + $0x20] sm:$0xff] %v1733
          %1766 = vst [vmem:[%s364 + $0x28] sm:$0xff] %v1734
          %1767 = vst [vmem:[%s364 + $0x30] sm:$0xff] %v1735
          %1768 = vst [vmem:[%s364 + $0x38] sm:$0xff] %v1736
          %1769 = vst [vmem:[%s364 + $0x40] sm:$0xff] %v1737
          %1770 = vst [vmem:[%s364 + $0x48] sm:$0xff] %v1738
          %1771 = vst [vmem:[%s364 + $0x50] sm:$0xff] %v1739
          %1772 = vst [vmem:[%s364 + $0x58] sm:$0xff] %v1740
          %1773 = vst [vmem:[%s364 + $0x60] sm:$0xff] %v1741
          %1774 = vst [vmem:[%s364 + $0x68] sm:$0xff] %v1742
          %1775 = vst [vmem:[%s364 + $0x70] sm:$0xff] %v1743
          %1776 = vst [vmem:[%s364 + $0x78] sm:$0xff] %v1744
          %1777 = vst [vmem:[%s364 + $0x80] sm:$0xff] %v1745
          %1778 = vst [vmem:[%s364 + $0x88] sm:$0xff] %v1746
          %1779 = vst [vmem:[%s364 + $0x90] sm:$0xff] %v1747
          %1780 = vst [vmem:[%s364 + $0x98] sm:$0xff] %v1748
          %1781 = vst [vmem:[%s364 + $0xa0] sm:$0xff] %v1749
          %1782 = vst [vmem:[%s364 + $0xa8] sm:$0xff] %v1750
          %1783 = vst [vmem:[%s364 + $0xb0] sm:$0xff] %v1751
          %1784 = vst [vmem:[%s364 + $0xb8] sm:$0xff] %v1752
          %1785 = vst [vmem:[%s364 + $0xc0] sm:$0xff] %v1753
          %1786 = vst [vmem:[%s364 + $0xc8] sm:$0xff] %v1754
          %1787 = vst [vmem:[%s364 + $0xd0] sm:$0xff] %v1755
          %1788 = vst [vmem:[%s364 + $0xd8] sm:$0xff] %v1756
          %1789 = vst [vmem:[%s364 + $0xe0] sm:$0xff] %v1757
          %1790 = vst [vmem:[%s364 + $0xe8] sm:$0xff] %v1758
          %1791 = vst [vmem:[%s364 + $0xf0] sm:$0xff] %v1759
          %1792 = vst [vmem:[%s364 + $0xf8] sm:$0xff] %v1760
        $region75: #{sage_conv.1} parent=62 // pred_fallthru
          _
        %s1793 = smul.u32 32, %s21
        %p1794 = scmp.lt.s32.totalorder %s1793, 63
        %s1795 = scalar_select %p1794, %s1793, 63
        %s1796 = smul.addr %s1795, 8
        %s1797 = scalar_lea.vmem %s6, %s1796
        // Predicated region
        $region76: #{sage_conv.1} parent=62 // pred_check
          %p1798 = pneg %p190
        $region77: #{sage_conv.1} parent=62 // pred_check_branch
          %1800 = sbr.rel (%p1798) target = $region79
        $region78: #{sage_conv.1} parent=62 // pred_region
          %s1801 = smul.u32 32, %s21
        $region79: #{sage_conv.1} parent=62 // pred_fallthru
          _
      $region63: #{sage_conv.1} parent=5 // pred_fallthru
        _
      %p1802 = scmp.le.s32.totalorder 2, %s12
      // Predicated region
      $region80: #{sage_conv.1} parent=5 // pred_check
        %p1803 = pneg %p1802
      $region81: #{sage_conv.1} parent=5 // pred_check_branch
        %1805 = sbr.rel (%p1803) target = $region83
      $region82: #{sage_conv.1} parent=5 // pred_region
        %s1806 = ssub.s32 %s12, 2
        // Predicated region
        $region84: #{sage_conv.1} parent=82 // pred_check
          %p1807 = pneg %p196
        $region85: #{sage_conv.1} parent=82 // pred_check_branch
          %1809 = sbr.rel (%p1807) target = $region87
        $region86: #{sage_conv.1} parent=82 // pred_region
          %s1810 = smul.u32 32, %s23
          %p1811 = scmp.lt.s32.totalorder %s1810, 63
          %s1812 = scalar_select %p1811, %s1810, 63
          %s1813 = smul.addr %s1812, 8
          %s1814 = scalar_lea.vmem %s6, %s1813
        $region87: #{sage_conv.1} parent=82 // pred_fallthru
          _
      $region83: #{sage_conv.1} parent=5 // pred_fallthru
        _
    $region6: #{sage_conv.1} parent=1 // loop_footer
      %s16 = sadd.s32 1, %s12
    $region7: #{sage_conv.1} parent=1 // loop_footer_branch
      %11 = sbr.rel target = $region3
    $region8: #{sage_conv.1} parent=1 // loop_exit
      _

</llo_original>
